<compile_context>
chip_gen: v7x
topology: tpu7x:2x2x1
jax: 0.10.0
libtpu: 0.0.40
codegen_flags: <defaults>
</compile_context>

<pallas_src>
import functools

import jax
import jax.numpy as jnp
from jax import lax
from jax.experimental import pallas as pl
from jax.experimental.pallas import tpu as pltpu


def _deep_eos_kernel(tokens_ref, table_ref, w_hh_ref, b_ref, w_out_ref,
                     b_out_ref, out_ref, xw_ref, *,
                     seq_len, batch, vocab_size, hidden_size):
    """Whole forward pass in one invocation (everything resident in VMEM)."""
    S, B, V, H = seq_len, batch, vocab_size, hidden_size
    SB = S * B

    # ---- fused embedding + input projection: one-hot (S*B,V) x (V,4H) ----
    # table = (emb @ W_ih) with the 0.5 sigmoid pre-scale folded into the
    # i/f/o columns; the one-hot matmul reproduces exact bf16 table rows
    # (f32 accumulation).  Result goes to VMEM scratch, not registers.
    tok = tokens_ref[...]                                         # (S*B, 1) int32
    vocab_iota = lax.broadcasted_iota(jnp.int32, (SB, V), 1)
    onehot = jnp.where(tok == vocab_iota, 1.0, 0.0).astype(jnp.bfloat16)
    xw_ref[...] = jnp.dot(onehot, table_ref[...],
                          preferred_element_type=jnp.float32) + b_ref[...]

    # ---- fully unrolled recurrence: only h @ W_hh per step ----
    # W_hh is read from VMEM inside the loop (not hoisted to registers:
    # (128,512) bf16 would pin ~32 vregs through the unrolled body).
    h = jnp.zeros((B, H), jnp.float32)
    c = jnp.zeros((B, H), jnp.float32)
    for t in range(S):                                            # S is static
        gates = xw_ref[t * B:(t + 1) * B, :] + jnp.dot(
            h.astype(jnp.bfloat16), w_hh_ref[...],
            preferred_element_type=jnp.float32)                   # (B, 4H) f32
        # PyTorch LSTM gate order [i, f, g, o]; 0.5 pre-scale already folded
        # into the i/f/o columns of table / W_hh / bias, so
        # sigmoid(x) == 0.5 * (tanh(gates_col) + 1) with no per-gate multiply
        # on the argument.  All elementwise math stays f32 (v5e guard rail).
        i_g = 0.5 * (jnp.tanh(gates[:, 0 * H:1 * H]) + 1.0)
        f_g = 0.5 * (jnp.tanh(gates[:, 1 * H:2 * H]) + 1.0)
        g_g = jnp.tanh(gates[:, 2 * H:3 * H])
        o_g = 0.5 * (jnp.tanh(gates[:, 3 * H:4 * H]) + 1.0)
        c = f_g * c + i_g * g_g
        h = o_g * jnp.tanh(c)

    # ---- final Linear on the last hidden state, lane-dense output slab ----
    out_ref[...] = (jnp.dot(h.astype(jnp.bfloat16), w_out_ref[...],
                            preferred_element_type=jnp.float32)
                    + b_out_ref[...])


def prepare_params(params, *, hidden_size):
    """One-time weight preprocessing (hoisted out of the forward hot path)."""
    H = hidden_size
    emb = params["embedding"].astype(jnp.float32)                 # (V, E)
    w_ih = params["w_ih"].astype(jnp.float32)                     # (E, 4H)
    w_hh = params["w_hh"].astype(jnp.float32)                     # (H, 4H)
    b = params["b"].astype(jnp.float32)                           # (1, 4H)
    w_out = params["w_out"].astype(jnp.float32)                   # (H, O)
    b_out = params["b_out"].astype(jnp.float32)                   # (1, O)

    # Fuse embedding with the input projection: (V, 4H) table.
    table = emb @ w_ih

    # Fold the 0.5 sigmoid pre-scale into the i/f/o gate columns
    # (exact: x0.5 is an exponent shift, no extra rounding even after bf16).
    scale = (jnp.ones((1, 4 * H), jnp.float32)
             .at[:, 0:2 * H].set(0.5)        # i, f gates
             .at[:, 3 * H:4 * H].set(0.5))   # o gate
    table = table * scale
    w_hh_s = w_hh * scale
    b_s = b * scale

    O = w_out.shape[1]
    OP = 128 * pl.cdiv(O, 128)               # lane-dense padded output width
    w_out_pad = jnp.zeros((H, OP), jnp.float32).at[:, :O].set(w_out)
    b_out_pad = jnp.zeros((1, OP), jnp.float32).at[:, :O].set(b_out)

    return {
        "table": table.astype(jnp.bfloat16),        # (V, 4H) bf16, pre-scaled
        "w_hh": w_hh_s.astype(jnp.bfloat16),        # (H, 4H) bf16, pre-scaled
        "b": b_s,                                   # (1, 4H) f32, pre-scaled
        "w_out": w_out_pad.astype(jnp.bfloat16),    # (H, OP) bf16
        "b_out": b_out_pad,                         # (1, OP) f32
        "out_dim": O,                               # python int
    }


def deep_eos_forward(tokens, prep, *, hidden_size):
    """tokens: (batch, seq) int32.  Returns logits (batch, output_size)."""
    B, S = tokens.shape
    V = prep["table"].shape[0]
    H = hidden_size
    O = prep["out_dim"]
    OP = prep["w_out"].shape[1]

    # Alignment constraints (sublane / lane) the kernel's static slices rely on.
    assert B % 8 == 0, "batch must be a multiple of 8 (sublane alignment)"
    assert H % 128 == 0, "hidden_size must be a multiple of 128 (lane alignment)"

    # time-major flat token ids: row t*B + b  <->  tokens[b, t]
    tokens_flat = jnp.transpose(tokens).reshape(S * B, 1).astype(jnp.int32)

    kernel = functools.partial(_deep_eos_kernel, seq_len=S, batch=B,
                               vocab_size=V, hidden_size=H)

    cost = pl.CostEstimate(
        flops=2 * S * B * V * 4 * H          # fused one-hot projection
              + S * 2 * B * H * 4 * H        # recurrence h @ W_hh
              + 2 * B * H * OP,              # output head
        transcendentals=S * 5 * B * H,       # 5 tanh per step
        bytes_accessed=(V * 4 * H * 2 + H * 4 * H * 2 + H * OP * 2
                        + S * B * 4 + 4 * H * 4 + OP * 4 + B * OP * 4),
    )

    out = pl.pallas_call(
        kernel,
        out_shape=jax.ShapeDtypeStruct((B, OP), jnp.float32),
        in_specs=[pl.BlockSpec(memory_space=pltpu.MemorySpace.VMEM)
                  for _ in range(6)],
        out_specs=pl.BlockSpec(memory_space=pltpu.MemorySpace.VMEM),
        scratch_shapes=[pltpu.VMEM((S * B, 4 * H), jnp.float32)],   # xw scratch
        cost_estimate=cost,
    )(tokens_flat, prep["table"], prep["w_hh"], prep["b"],
      prep["w_out"], prep["b_out"])
    return out[:, :O]


def deep_eos_reference_matched(tokens, prep, *, hidden_size):
    """Pure-JAX reference mirroring the kernel's numerics exactly
    (same prepared params, same folded scaling, bf16 matmul operands)."""
    H = hidden_size
    B, S = tokens.shape
    table = prep["table"]                     # (V, 4H) bf16, pre-scaled
    w_hh = prep["w_hh"]                       # (H, 4H) bf16, pre-scaled
    b = prep["b"]                             # (1, 4H) f32, pre-scaled
    w_out = prep["w_out"]                     # (H, OP) bf16
    b_out = prep["b_out"]                     # (1, OP) f32
    O = prep["out_dim"]

    # one-hot matmul over bf16 table == exact row lookup (f32 accumulation)
    x = table[jnp.transpose(tokens)].astype(jnp.float32)          # (S, B, 4H)
    xw = x + b

    h = jnp.zeros((B, H), jnp.float32)
    c = jnp.zeros((B, H), jnp.float32)
    for t in range(S):
        gates = xw[t] + jnp.dot(h.astype(jnp.bfloat16), w_hh,
                                preferred_element_type=jnp.float32)
        i_g = 0.5 * (jnp.tanh(gates[:, 0 * H:1 * H]) + 1.0)
        f_g = 0.5 * (jnp.tanh(gates[:, 1 * H:2 * H]) + 1.0)
        g_g = jnp.tanh(gates[:, 2 * H:3 * H])
        o_g = 0.5 * (jnp.tanh(gates[:, 3 * H:4 * H]) + 1.0)
        c = f_g * c + i_g * g_g
        h = o_g * jnp.tanh(c)
    out = jnp.dot(h.astype(jnp.bfloat16), w_out,
                  preferred_element_type=jnp.float32) + b_out
    return out[:, :O]


def deep_eos_reference_f32(tokens, params, *, hidden_size):
    """Pure-f32 reference of the original module semantics (sanity check)."""
    H = hidden_size
    B = tokens.shape[0]
    emb = params["embedding"][tokens].astype(jnp.float32)          # (B, S, E)
    x = jnp.transpose(emb, (1, 0, 2))                              # (S, B, E)

    def step(carry, x_t):
        h, c = carry
        gates = x_t @ params["w_ih"] + h @ params["w_hh"] + params["b"]
        i_g = jax.nn.sigmoid(gates[:, 0 * H:1 * H])
        f_g = jax.nn.sigmoid(gates[:, 1 * H:2 * H])
        g_g = jnp.tanh(gates[:, 2 * H:3 * H])
        o_g = jax.nn.sigmoid(gates[:, 3 * H:4 * H])
        c_new = f_g * c + i_g * g_g
        h_new = o_g * jnp.tanh(c_new)
        return (h_new, c_new), None

    h0 = jnp.zeros((B, H), jnp.float32)
    c0 = jnp.zeros((B, H), jnp.float32)
    (h_final, _), _ = lax.scan(step, (h0, c0), x)
    return h_final @ params["w_out"] + params["b_out"]


def init_params(key, *, vocab_size, embedding_length, hidden_size, output_size):
    ks = jax.random.split(key, 7)
    scale = 0.1
    H = hidden_size
    return {
        "embedding": scale * jax.random.normal(
            ks[0], (vocab_size, embedding_length), jnp.float32),
        # stored transposed relative to PyTorch: (E, 4H) / (H, 4H)
        "w_ih": scale * jax.random.normal(
            ks[1], (embedding_length, 4 * H), jnp.float32),
        "w_hh": scale * jax.random.normal(
            ks[2], (H, 4 * H), jnp.float32),
        "b": (scale * jax.random.normal(ks[3], (1, 4 * H), jnp.float32)
              + scale * jax.random.normal(ks[4], (1, 4 * H), jnp.float32)),
        "w_out": scale * jax.random.normal(
            ks[5], (H, output_size), jnp.float32),
        "b_out": scale * jax.random.normal(
            ks[6], (1, output_size), jnp.float32),
    }


if __name__ == "__main__":
    # Small, TPU-tile-friendly shapes consistent with the module:
    #   batch=8 context windows, seq=8 characters per window,
    #   embedding_length=128, hidden_size=128, output_size=2, char vocab=64.
    VOCAB = 64
    BATCH = 8
    SEQ = 8
    EMBED = 128
    HIDDEN = 128
    OUT = 2

    key = jax.random.PRNGKey(0)
    k_param, k_tok = jax.random.split(key)
    params = init_params(k_param, vocab_size=VOCAB, embedding_length=EMBED,
                         hidden_size=HIDDEN, output_size=OUT)
    tokens = jax.random.randint(k_tok, (BATCH, SEQ), 0, VOCAB, dtype=jnp.int32)

    # one-time weight preprocessing (outside the forward hot path)
    prep = jax.tree_util.tree_map(
        lambda x: jax.block_until_ready(x) if isinstance(x, jax.Array) else x,
        prepare_params(params, hidden_size=HIDDEN))

    logits = jax.block_until_ready(
        deep_eos_forward(tokens, prep, hidden_size=HIDDEN))
    assert logits.shape == (BATCH, OUT)

    # tight check vs a reference using identical bf16/folded-scale numerics
    ref_matched = jax.block_until_ready(
        deep_eos_reference_matched(tokens, prep, hidden_size=HIDDEN))
    assert jnp.allclose(logits, ref_matched, atol=1e-4, rtol=1e-4), (
        f"bf16-matched mismatch: {jnp.max(jnp.abs(logits - ref_matched))}")

    # loose check vs the full-f32 original module semantics
    ref_f32 = jax.block_until_ready(
        deep_eos_reference_f32(tokens, params, hidden_size=HIDDEN))
    assert jnp.allclose(logits, ref_f32, atol=2e-2, rtol=2e-2), (
        f"f32 mismatch: {jnp.max(jnp.abs(logits - ref_f32))}")

    print("KERNEL_OK")
</pallas_src>

<mosaic_0001>
module attributes {stable_mosaic.version = 11 : i64} {
  func.func @_deep_eos_kernel(%arg0: memref<64x1xi32, #tpu.memory_space<vmem>>, %arg1: memref<64x512xbf16, #tpu.memory_space<vmem>>, %arg2: memref<128x512xbf16, #tpu.memory_space<vmem>>, %arg3: memref<1x512xf32, #tpu.memory_space<vmem>>, %arg4: memref<128x128xbf16, #tpu.memory_space<vmem>>, %arg5: memref<1x128xf32, #tpu.memory_space<vmem>>, %arg6: memref<8x128xf32, #tpu.memory_space<vmem>>, %arg7: memref<64x512xf32, #tpu.memory_space<vmem>>) attributes {dimension_semantics = [], scalar_prefetch = 0 : i64, scratch_operands = 1 : i64, tpu.core_type = #tpu.core_type<tc>} {
    %c0 = arith.constant 0 : index
    %c0_0 = arith.constant 0 : index
    %0 = vector.load %arg0[%c0, %c0_0] : memref<64x1xi32, #tpu.memory_space<vmem>>, vector<64x1xi32>
    %1 = tpu.iota {dimensions = array<i32: 1>} : vector<64x64xi32>
    %2 = vector.broadcast %0 : vector<64x1xi32> to vector<64x64xi32>
    %3 = arith.cmpi eq, %2, %1 : vector<64x64xi32>
    %cst = arith.constant 1.000000e+00 : f32
    %cst_1 = arith.constant 0.000000e+00 : f32
    %4 = vector.broadcast %cst : f32 to vector<64x64xf32>
    %5 = vector.broadcast %cst_1 : f32 to vector<64x64xf32>
    %6 = arith.select %3, %4, %5 : vector<64x64xi1>, vector<64x64xf32>
    %7 = arith.truncf %6 : vector<64x64xf32> to vector<64x64xbf16>
    %c0_2 = arith.constant 0 : index
    %c0_3 = arith.constant 0 : index
    %8 = vector.load %arg1[%c0_2, %c0_3] : memref<64x512xbf16, #tpu.memory_space<vmem>>, vector<64x512xbf16>
    %cst_4 = arith.constant dense<0.000000e+00> : vector<64x512xf32>
    %9 = tpu.matmul %7, %8, %cst_4 {dimension_numbers = #tpu.dot_dimension_numbers<[1], [0], [0], [1], [0, 0, 1, 1], [], []>} : vector<64x64xbf16>, vector<64x512xbf16>, vector<64x512xf32> -> vector<64x512xf32>
    %c0_5 = arith.constant 0 : index
    %c0_6 = arith.constant 0 : index
    %10 = vector.load %arg3[%c0_5, %c0_6] : memref<1x512xf32, #tpu.memory_space<vmem>>, vector<1x512xf32>
    %11 = vector.broadcast %10 : vector<1x512xf32> to vector<64x512xf32>
    %12 = arith.addf %9, %11 : vector<64x512xf32>
    %c0_7 = arith.constant 0 : index
    %c0_8 = arith.constant 0 : index
    %13 = vector.load %arg7[%c0_7, %c0_8] : memref<64x512xf32, #tpu.memory_space<vmem>>, vector<64x512xf32>
    tpu.vector_store %arg7[%c0_7, %c0_8], %12 {strides = array<i32>} : memref<64x512xf32, #tpu.memory_space<vmem>>, vector<64x512xf32>,
    %cst_9 = arith.constant 0.000000e+00 : f32
    %14 = vector.broadcast %cst_9 : f32 to vector<8x128xf32>
    %cst_10 = arith.constant 0.000000e+00 : f32
    %15 = vector.broadcast %cst_10 : f32 to vector<8x128xf32>
    %c0_11 = arith.constant 0 : index
    %c0_12 = arith.constant 0 : index
    %16 = vector.load %arg7[%c0_11, %c0_12] : memref<64x512xf32, #tpu.memory_space<vmem>>, vector<8x512xf32>
    %17 = arith.truncf %14 : vector<8x128xf32> to vector<8x128xbf16>
    %c0_13 = arith.constant 0 : index
    %c0_14 = arith.constant 0 : index
    %18 = vector.load %arg2[%c0_13, %c0_14] : memref<128x512xbf16, #tpu.memory_space<vmem>>, vector<128x512xbf16>
    %cst_15 = arith.constant dense<0.000000e+00> : vector<8x512xf32>
    %19 = tpu.matmul %17, %18, %cst_15 {dimension_numbers = #tpu.dot_dimension_numbers<[1], [0], [0], [1], [0, 0, 1, 1], [], []>} : vector<8x128xbf16>, vector<128x512xbf16>, vector<8x512xf32> -> vector<8x512xf32>
    %20 = arith.addf %16, %19 : vector<8x512xf32>
    %21 = vector.extract_strided_slice %20 {offsets = [0, 0], sizes = [8, 128], strides = [1, 1]} : vector<8x512xf32> to vector<8x128xf32>
    %22 = math.tanh %21 : vector<8x128xf32>
    %cst_16 = arith.constant 1.000000e+00 : f32
    %23 = vector.broadcast %cst_16 : f32 to vector<8x128xf32>
    %24 = arith.addf %22, %23 : vector<8x128xf32>
    %cst_17 = arith.constant 5.000000e-01 : f32
    %25 = vector.broadcast %cst_17 : f32 to vector<8x128xf32>
    %26 = arith.mulf %25, %24 : vector<8x128xf32>
    %27 = vector.extract_strided_slice %20 {offsets = [0, 128], sizes = [8, 128], strides = [1, 1]} : vector<8x512xf32> to vector<8x128xf32>
    %28 = math.tanh %27 : vector<8x128xf32>
    %cst_18 = arith.constant 1.000000e+00 : f32
    %29 = vector.broadcast %cst_18 : f32 to vector<8x128xf32>
    %30 = arith.addf %28, %29 : vector<8x128xf32>
    %cst_19 = arith.constant 5.000000e-01 : f32
    %31 = vector.broadcast %cst_19 : f32 to vector<8x128xf32>
    %32 = arith.mulf %31, %30 : vector<8x128xf32>
    %33 = vector.extract_strided_slice %20 {offsets = [0, 256], sizes = [8, 128], strides = [1, 1]} : vector<8x512xf32> to vector<8x128xf32>
    %34 = math.tanh %33 : vector<8x128xf32>
    %35 = vector.extract_strided_slice %20 {offsets = [0, 384], sizes = [8, 128], strides = [1, 1]} : vector<8x512xf32> to vector<8x128xf32>
    %36 = math.tanh %35 : vector<8x128xf32>
    %cst_20 = arith.constant 1.000000e+00 : f32
    %37 = vector.broadcast %cst_20 : f32 to vector<8x128xf32>
    %38 = arith.addf %36, %37 : vector<8x128xf32>
    %cst_21 = arith.constant 5.000000e-01 : f32
    %39 = vector.broadcast %cst_21 : f32 to vector<8x128xf32>
    %40 = arith.mulf %39, %38 : vector<8x128xf32>
    %41 = arith.mulf %32, %15 : vector<8x128xf32>
    %42 = arith.mulf %26, %34 : vector<8x128xf32>
    %43 = arith.addf %41, %42 : vector<8x128xf32>
    %44 = math.tanh %43 : vector<8x128xf32>
    %45 = arith.mulf %40, %44 : vector<8x128xf32>
    %c8 = arith.constant 8 : index
    %c0_22 = arith.constant 0 : index
    %46 = vector.load %arg7[%c8, %c0_22] : memref<64x512xf32, #tpu.memory_space<vmem>>, vector<8x512xf32>
    %47 = arith.truncf %45 : vector<8x128xf32> to vector<8x128xbf16>
    %c0_23 = arith.constant 0 : index
    %c0_24 = arith.constant 0 : index
    %48 = vector.load %arg2[%c0_23, %c0_24] : memref<128x512xbf16, #tpu.memory_space<vmem>>, vector<128x512xbf16>
    %cst_25 = arith.constant dense<0.000000e+00> : vector<8x512xf32>
    %49 = tpu.matmul %47, %48, %cst_25 {dimension_numbers = #tpu.dot_dimension_numbers<[1], [0], [0], [1], [0, 0, 1, 1], [], []>} : vector<8x128xbf16>, vector<128x512xbf16>, vector<8x512xf32> -> vector<8x512xf32>
    %50 = arith.addf %46, %49 : vector<8x512xf32>
    %51 = vector.extract_strided_slice %50 {offsets = [0, 0], sizes = [8, 128], strides = [1, 1]} : vector<8x512xf32> to vector<8x128xf32>
    %52 = math.tanh %51 : vector<8x128xf32>
    %cst_26 = arith.constant 1.000000e+00 : f32
    %53 = vector.broadcast %cst_26 : f32 to vector<8x128xf32>
    %54 = arith.addf %52, %53 : vector<8x128xf32>
    %cst_27 = arith.constant 5.000000e-01 : f32
    %55 = vector.broadcast %cst_27 : f32 to vector<8x128xf32>
    %56 = arith.mulf %55, %54 : vector<8x128xf32>
    %57 = vector.extract_strided_slice %50 {offsets = [0, 128], sizes = [8, 128], strides = [1, 1]} : vector<8x512xf32> to vector<8x128xf32>
    %58 = math.tanh %57 : vector<8x128xf32>
    %cst_28 = arith.constant 1.000000e+00 : f32
    %59 = vector.broadcast %cst_28 : f32 to vector<8x128xf32>
    %60 = arith.addf %58, %59 : vector<8x128xf32>
    %cst_29 = arith.constant 5.000000e-01 : f32
    %61 = vector.broadcast %cst_29 : f32 to vector<8x128xf32>
    %62 = arith.mulf %61, %60 : vector<8x128xf32>
    %63 = vector.extract_strided_slice %50 {offsets = [0, 256], sizes = [8, 128], strides = [1, 1]} : vector<8x512xf32> to vector<8x128xf32>
    %64 = math.tanh %63 : vector<8x128xf32>
    %65 = vector.extract_strided_slice %50 {offsets = [0, 384], sizes = [8, 128], strides = [1, 1]} : vector<8x512xf32> to vector<8x128xf32>
    %66 = math.tanh %65 : vector<8x128xf32>
    %cst_30 = arith.constant 1.000000e+00 : f32
    %67 = vector.broadcast %cst_30 : f32 to vector<8x128xf32>
    %68 = arith.addf %66, %67 : vector<8x128xf32>
    %cst_31 = arith.constant 5.000000e-01 : f32
    %69 = vector.broadcast %cst_31 : f32 to vector<8x128xf32>
    %70 = arith.mulf %69, %68 : vector<8x128xf32>
    %71 = arith.mulf %62, %43 : vector<8x128xf32>
    %72 = arith.mulf %56, %64 : vector<8x128xf32>
    %73 = arith.addf %71, %72 : vector<8x128xf32>
    %74 = math.tanh %73 : vector<8x128xf32>
    %75 = arith.mulf %70, %74 : vector<8x128xf32>
    %c16 = arith.constant 16 : index
    %c0_32 = arith.constant 0 : index
    %76 = vector.load %arg7[%c16, %c0_32] : memref<64x512xf32, #tpu.memory_space<vmem>>, vector<8x512xf32>
    %77 = arith.truncf %75 : vector<8x128xf32> to vector<8x128xbf16>
    %c0_33 = arith.constant 0 : index
    %c0_34 = arith.constant 0 : index
    %78 = vector.load %arg2[%c0_33, %c0_34] : memref<128x512xbf16, #tpu.memory_space<vmem>>, vector<128x512xbf16>
    %cst_35 = arith.constant dense<0.000000e+00> : vector<8x512xf32>
    %79 = tpu.matmul %77, %78, %cst_35 {dimension_numbers = #tpu.dot_dimension_numbers<[1], [0], [0], [1], [0, 0, 1, 1], [], []>} : vector<8x128xbf16>, vector<128x512xbf16>, vector<8x512xf32> -> vector<8x512xf32>
    %80 = arith.addf %76, %79 : vector<8x512xf32>
    %81 = vector.extract_strided_slice %80 {offsets = [0, 0], sizes = [8, 128], strides = [1, 1]} : vector<8x512xf32> to vector<8x128xf32>
    %82 = math.tanh %81 : vector<8x128xf32>
    %cst_36 = arith.constant 1.000000e+00 : f32
    %83 = vector.broadcast %cst_36 : f32 to vector<8x128xf32>
    %84 = arith.addf %82, %83 : vector<8x128xf32>
    %cst_37 = arith.constant 5.000000e-01 : f32
    %85 = vector.broadcast %cst_37 : f32 to vector<8x128xf32>
    %86 = arith.mulf %85, %84 : vector<8x128xf32>
    %87 = vector.extract_strided_slice %80 {offsets = [0, 128], sizes = [8, 128], strides = [1, 1]} : vector<8x512xf32> to vector<8x128xf32>
    %88 = math.tanh %87 : vector<8x128xf32>
    %cst_38 = arith.constant 1.000000e+00 : f32
    %89 = vector.broadcast %cst_38 : f32 to vector<8x128xf32>
    %90 = arith.addf %88, %89 : vector<8x128xf32>
    %cst_39 = arith.constant 5.000000e-01 : f32
    %91 = vector.broadcast %cst_39 : f32 to vector<8x128xf32>
    %92 = arith.mulf %91, %90 : vector<8x128xf32>
    %93 = vector.extract_strided_slice %80 {offsets = [0, 256], sizes = [8, 128], strides = [1, 1]} : vector<8x512xf32> to vector<8x128xf32>
    %94 = math.tanh %93 : vector<8x128xf32>
    %95 = vector.extract_strided_slice %80 {offsets = [0, 384], sizes = [8, 128], strides = [1, 1]} : vector<8x512xf32> to vector<8x128xf32>
    %96 = math.tanh %95 : vector<8x128xf32>
    %cst_40 = arith.constant 1.000000e+00 : f32
    %97 = vector.broadcast %cst_40 : f32 to vector<8x128xf32>
    %98 = arith.addf %96, %97 : vector<8x128xf32>
    %cst_41 = arith.constant 5.000000e-01 : f32
    %99 = vector.broadcast %cst_41 : f32 to vector<8x128xf32>
    %100 = arith.mulf %99, %98 : vector<8x128xf32>
    %101 = arith.mulf %92, %73 : vector<8x128xf32>
    %102 = arith.mulf %86, %94 : vector<8x128xf32>
    %103 = arith.addf %101, %102 : vector<8x128xf32>
    %104 = math.tanh %103 : vector<8x128xf32>
    %105 = arith.mulf %100, %104 : vector<8x128xf32>
    %c24 = arith.constant 24 : index
    %c0_42 = arith.constant 0 : index
    %106 = vector.load %arg7[%c24, %c0_42] : memref<64x512xf32, #tpu.memory_space<vmem>>, vector<8x512xf32>
    %107 = arith.truncf %105 : vector<8x128xf32> to vector<8x128xbf16>
    %c0_43 = arith.constant 0 : index
    %c0_44 = arith.constant 0 : index
    %108 = vector.load %arg2[%c0_43, %c0_44] : memref<128x512xbf16, #tpu.memory_space<vmem>>, vector<128x512xbf16>
    %cst_45 = arith.constant dense<0.000000e+00> : vector<8x512xf32>
    %109 = tpu.matmul %107, %108, %cst_45 {dimension_numbers = #tpu.dot_dimension_numbers<[1], [0], [0], [1], [0, 0, 1, 1], [], []>} : vector<8x128xbf16>, vector<128x512xbf16>, vector<8x512xf32> -> vector<8x512xf32>
    %110 = arith.addf %106, %109 : vector<8x512xf32>
    %111 = vector.extract_strided_slice %110 {offsets = [0, 0], sizes = [8, 128], strides = [1, 1]} : vector<8x512xf32> to vector<8x128xf32>
    %112 = math.tanh %111 : vector<8x128xf32>
    %cst_46 = arith.constant 1.000000e+00 : f32
    %113 = vector.broadcast %cst_46 : f32 to vector<8x128xf32>
    %114 = arith.addf %112, %113 : vector<8x128xf32>
    %cst_47 = arith.constant 5.000000e-01 : f32
    %115 = vector.broadcast %cst_47 : f32 to vector<8x128xf32>
    %116 = arith.mulf %115, %114 : vector<8x128xf32>
    %117 = vector.extract_strided_slice %110 {offsets = [0, 128], sizes = [8, 128], strides = [1, 1]} : vector<8x512xf32> to vector<8x128xf32>
    %118 = math.tanh %117 : vector<8x128xf32>
    %cst_48 = arith.constant 1.000000e+00 : f32
    %119 = vector.broadcast %cst_48 : f32 to vector<8x128xf32>
    %120 = arith.addf %118, %119 : vector<8x128xf32>
    %cst_49 = arith.constant 5.000000e-01 : f32
    %121 = vector.broadcast %cst_49 : f32 to vector<8x128xf32>
    %122 = arith.mulf %121, %120 : vector<8x128xf32>
    %123 = vector.extract_strided_slice %110 {offsets = [0, 256], sizes = [8, 128], strides = [1, 1]} : vector<8x512xf32> to vector<8x128xf32>
    %124 = math.tanh %123 : vector<8x128xf32>
    %125 = vector.extract_strided_slice %110 {offsets = [0, 384], sizes = [8, 128], strides = [1, 1]} : vector<8x512xf32> to vector<8x128xf32>
    %126 = math.tanh %125 : vector<8x128xf32>
    %cst_50 = arith.constant 1.000000e+00 : f32
    %127 = vector.broadcast %cst_50 : f32 to vector<8x128xf32>
    %128 = arith.addf %126, %127 : vector<8x128xf32>
    %cst_51 = arith.constant 5.000000e-01 : f32
    %129 = vector.broadcast %cst_51 : f32 to vector<8x128xf32>
    %130 = arith.mulf %129, %128 : vector<8x128xf32>
    %131 = arith.mulf %122, %103 : vector<8x128xf32>
    %132 = arith.mulf %116, %124 : vector<8x128xf32>
    %133 = arith.addf %131, %132 : vector<8x128xf32>
    %134 = math.tanh %133 : vector<8x128xf32>
    %135 = arith.mulf %130, %134 : vector<8x128xf32>
    %c32 = arith.constant 32 : index
    %c0_52 = arith.constant 0 : index
    %136 = vector.load %arg7[%c32, %c0_52] : memref<64x512xf32, #tpu.memory_space<vmem>>, vector<8x512xf32>
    %137 = arith.truncf %135 : vector<8x128xf32> to vector<8x128xbf16>
    %c0_53 = arith.constant 0 : index
    %c0_54 = arith.constant 0 : index
    %138 = vector.load %arg2[%c0_53, %c0_54] : memref<128x512xbf16, #tpu.memory_space<vmem>>, vector<128x512xbf16>
    %cst_55 = arith.constant dense<0.000000e+00> : vector<8x512xf32>
    %139 = tpu.matmul %137, %138, %cst_55 {dimension_numbers = #tpu.dot_dimension_numbers<[1], [0], [0], [1], [0, 0, 1, 1], [], []>} : vector<8x128xbf16>, vector<128x512xbf16>, vector<8x512xf32> -> vector<8x512xf32>
    %140 = arith.addf %136, %139 : vector<8x512xf32>
    %141 = vector.extract_strided_slice %140 {offsets = [0, 0], sizes = [8, 128], strides = [1, 1]} : vector<8x512xf32> to vector<8x128xf32>
    %142 = math.tanh %141 : vector<8x128xf32>
    %cst_56 = arith.constant 1.000000e+00 : f32
    %143 = vector.broadcast %cst_56 : f32 to vector<8x128xf32>
    %144 = arith.addf %142, %143 : vector<8x128xf32>
    %cst_57 = arith.constant 5.000000e-01 : f32
    %145 = vector.broadcast %cst_57 : f32 to vector<8x128xf32>
    %146 = arith.mulf %145, %144 : vector<8x128xf32>
    %147 = vector.extract_strided_slice %140 {offsets = [0, 128], sizes = [8, 128], strides = [1, 1]} : vector<8x512xf32> to vector<8x128xf32>
    %148 = math.tanh %147 : vector<8x128xf32>
    %cst_58 = arith.constant 1.000000e+00 : f32
    %149 = vector.broadcast %cst_58 : f32 to vector<8x128xf32>
    %150 = arith.addf %148, %149 : vector<8x128xf32>
    %cst_59 = arith.constant 5.000000e-01 : f32
    %151 = vector.broadcast %cst_59 : f32 to vector<8x128xf32>
    %152 = arith.mulf %151, %150 : vector<8x128xf32>
    %153 = vector.extract_strided_slice %140 {offsets = [0, 256], sizes = [8, 128], strides = [1, 1]} : vector<8x512xf32> to vector<8x128xf32>
    %154 = math.tanh %153 : vector<8x128xf32>
    %155 = vector.extract_strided_slice %140 {offsets = [0, 384], sizes = [8, 128], strides = [1, 1]} : vector<8x512xf32> to vector<8x128xf32>
    %156 = math.tanh %155 : vector<8x128xf32>
    %cst_60 = arith.constant 1.000000e+00 : f32
    %157 = vector.broadcast %cst_60 : f32 to vector<8x128xf32>
    %158 = arith.addf %156, %157 : vector<8x128xf32>
    %cst_61 = arith.constant 5.000000e-01 : f32
    %159 = vector.broadcast %cst_61 : f32 to vector<8x128xf32>
    %160 = arith.mulf %159, %158 : vector<8x128xf32>
    %161 = arith.mulf %152, %133 : vector<8x128xf32>
    %162 = arith.mulf %146, %154 : vector<8x128xf32>
    %163 = arith.addf %161, %162 : vector<8x128xf32>
    %164 = math.tanh %163 : vector<8x128xf32>
    %165 = arith.mulf %160, %164 : vector<8x128xf32>
    %c40 = arith.constant 40 : index
    %c0_62 = arith.constant 0 : index
    %166 = vector.load %arg7[%c40, %c0_62] : memref<64x512xf32, #tpu.memory_space<vmem>>, vector<8x512xf32>
    %167 = arith.truncf %165 : vector<8x128xf32> to vector<8x128xbf16>
    %c0_63 = arith.constant 0 : index
    %c0_64 = arith.constant 0 : index
    %168 = vector.load %arg2[%c0_63, %c0_64] : memref<128x512xbf16, #tpu.memory_space<vmem>>, vector<128x512xbf16>
    %cst_65 = arith.constant dense<0.000000e+00> : vector<8x512xf32>
    %169 = tpu.matmul %167, %168, %cst_65 {dimension_numbers = #tpu.dot_dimension_numbers<[1], [0], [0], [1], [0, 0, 1, 1], [], []>} : vector<8x128xbf16>, vector<128x512xbf16>, vector<8x512xf32> -> vector<8x512xf32>
    %170 = arith.addf %166, %169 : vector<8x512xf32>
    %171 = vector.extract_strided_slice %170 {offsets = [0, 0], sizes = [8, 128], strides = [1, 1]} : vector<8x512xf32> to vector<8x128xf32>
    %172 = math.tanh %171 : vector<8x128xf32>
    %cst_66 = arith.constant 1.000000e+00 : f32
    %173 = vector.broadcast %cst_66 : f32 to vector<8x128xf32>
    %174 = arith.addf %172, %173 : vector<8x128xf32>
    %cst_67 = arith.constant 5.000000e-01 : f32
    %175 = vector.broadcast %cst_67 : f32 to vector<8x128xf32>
    %176 = arith.mulf %175, %174 : vector<8x128xf32>
    %177 = vector.extract_strided_slice %170 {offsets = [0, 128], sizes = [8, 128], strides = [1, 1]} : vector<8x512xf32> to vector<8x128xf32>
    %178 = math.tanh %177 : vector<8x128xf32>
    %cst_68 = arith.constant 1.000000e+00 : f32
    %179 = vector.broadcast %cst_68 : f32 to vector<8x128xf32>
    %180 = arith.addf %178, %179 : vector<8x128xf32>
    %cst_69 = arith.constant 5.000000e-01 : f32
    %181 = vector.broadcast %cst_69 : f32 to vector<8x128xf32>
    %182 = arith.mulf %181, %180 : vector<8x128xf32>
    %183 = vector.extract_strided_slice %170 {offsets = [0, 256], sizes = [8, 128], strides = [1, 1]} : vector<8x512xf32> to vector<8x128xf32>
    %184 = math.tanh %183 : vector<8x128xf32>
    %185 = vector.extract_strided_slice %170 {offsets = [0, 384], sizes = [8, 128], strides = [1, 1]} : vector<8x512xf32> to vector<8x128xf32>
    %186 = math.tanh %185 : vector<8x128xf32>
    %cst_70 = arith.constant 1.000000e+00 : f32
    %187 = vector.broadcast %cst_70 : f32 to vector<8x128xf32>
    %188 = arith.addf %186, %187 : vector<8x128xf32>
    %cst_71 = arith.constant 5.000000e-01 : f32
    %189 = vector.broadcast %cst_71 : f32 to vector<8x128xf32>
    %190 = arith.mulf %189, %188 : vector<8x128xf32>
    %191 = arith.mulf %182, %163 : vector<8x128xf32>
    %192 = arith.mulf %176, %184 : vector<8x128xf32>
    %193 = arith.addf %191, %192 : vector<8x128xf32>
    %194 = math.tanh %193 : vector<8x128xf32>
    %195 = arith.mulf %190, %194 : vector<8x128xf32>
    %c48 = arith.constant 48 : index
    %c0_72 = arith.constant 0 : index
    %196 = vector.load %arg7[%c48, %c0_72] : memref<64x512xf32, #tpu.memory_space<vmem>>, vector<8x512xf32>
    %197 = arith.truncf %195 : vector<8x128xf32> to vector<8x128xbf16>
    %c0_73 = arith.constant 0 : index
    %c0_74 = arith.constant 0 : index
    %198 = vector.load %arg2[%c0_73, %c0_74] : memref<128x512xbf16, #tpu.memory_space<vmem>>, vector<128x512xbf16>
    %cst_75 = arith.constant dense<0.000000e+00> : vector<8x512xf32>
    %199 = tpu.matmul %197, %198, %cst_75 {dimension_numbers = #tpu.dot_dimension_numbers<[1], [0], [0], [1], [0, 0, 1, 1], [], []>} : vector<8x128xbf16>, vector<128x512xbf16>, vector<8x512xf32> -> vector<8x512xf32>
    %200 = arith.addf %196, %199 : vector<8x512xf32>
    %201 = vector.extract_strided_slice %200 {offsets = [0, 0], sizes = [8, 128], strides = [1, 1]} : vector<8x512xf32> to vector<8x128xf32>
    %202 = math.tanh %201 : vector<8x128xf32>
    %cst_76 = arith.constant 1.000000e+00 : f32
    %203 = vector.broadcast %cst_76 : f32 to vector<8x128xf32>
    %204 = arith.addf %202, %203 : vector<8x128xf32>
    %cst_77 = arith.constant 5.000000e-01 : f32
    %205 = vector.broadcast %cst_77 : f32 to vector<8x128xf32>
    %206 = arith.mulf %205, %204 : vector<8x128xf32>
    %207 = vector.extract_strided_slice %200 {offsets = [0, 128], sizes = [8, 128], strides = [1, 1]} : vector<8x512xf32> to vector<8x128xf32>
    %208 = math.tanh %207 : vector<8x128xf32>
    %cst_78 = arith.constant 1.000000e+00 : f32
    %209 = vector.broadcast %cst_78 : f32 to vector<8x128xf32>
    %210 = arith.addf %208, %209 : vector<8x128xf32>
    %cst_79 = arith.constant 5.000000e-01 : f32
    %211 = vector.broadcast %cst_79 : f32 to vector<8x128xf32>
    %212 = arith.mulf %211, %210 : vector<8x128xf32>
    %213 = vector.extract_strided_slice %200 {offsets = [0, 256], sizes = [8, 128], strides = [1, 1]} : vector<8x512xf32> to vector<8x128xf32>
    %214 = math.tanh %213 : vector<8x128xf32>
    %215 = vector.extract_strided_slice %200 {offsets = [0, 384], sizes = [8, 128], strides = [1, 1]} : vector<8x512xf32> to vector<8x128xf32>
    %216 = math.tanh %215 : vector<8x128xf32>
    %cst_80 = arith.constant 1.000000e+00 : f32
    %217 = vector.broadcast %cst_80 : f32 to vector<8x128xf32>
    %218 = arith.addf %216, %217 : vector<8x128xf32>
    %cst_81 = arith.constant 5.000000e-01 : f32
    %219 = vector.broadcast %cst_81 : f32 to vector<8x128xf32>
    %220 = arith.mulf %219, %218 : vector<8x128xf32>
    %221 = arith.mulf %212, %193 : vector<8x128xf32>
    %222 = arith.mulf %206, %214 : vector<8x128xf32>
    %223 = arith.addf %221, %222 : vector<8x128xf32>
    %224 = math.tanh %223 : vector<8x128xf32>
    %225 = arith.mulf %220, %224 : vector<8x128xf32>
    %c56 = arith.constant 56 : index
    %c0_82 = arith.constant 0 : index
    %226 = vector.load %arg7[%c56, %c0_82] : memref<64x512xf32, #tpu.memory_space<vmem>>, vector<8x512xf32>
    %227 = arith.truncf %225 : vector<8x128xf32> to vector<8x128xbf16>
    %c0_83 = arith.constant 0 : index
    %c0_84 = arith.constant 0 : index
    %228 = vector.load %arg2[%c0_83, %c0_84] : memref<128x512xbf16, #tpu.memory_space<vmem>>, vector<128x512xbf16>
    %cst_85 = arith.constant dense<0.000000e+00> : vector<8x512xf32>
    %229 = tpu.matmul %227, %228, %cst_85 {dimension_numbers = #tpu.dot_dimension_numbers<[1], [0], [0], [1], [0, 0, 1, 1], [], []>} : vector<8x128xbf16>, vector<128x512xbf16>, vector<8x512xf32> -> vector<8x512xf32>
    %230 = arith.addf %226, %229 : vector<8x512xf32>
    %231 = vector.extract_strided_slice %230 {offsets = [0, 0], sizes = [8, 128], strides = [1, 1]} : vector<8x512xf32> to vector<8x128xf32>
    %232 = math.tanh %231 : vector<8x128xf32>
    %cst_86 = arith.constant 1.000000e+00 : f32
    %233 = vector.broadcast %cst_86 : f32 to vector<8x128xf32>
    %234 = arith.addf %232, %233 : vector<8x128xf32>
    %cst_87 = arith.constant 5.000000e-01 : f32
    %235 = vector.broadcast %cst_87 : f32 to vector<8x128xf32>
    %236 = arith.mulf %235, %234 : vector<8x128xf32>
    %237 = vector.extract_strided_slice %230 {offsets = [0, 128], sizes = [8, 128], strides = [1, 1]} : vector<8x512xf32> to vector<8x128xf32>
    %238 = math.tanh %237 : vector<8x128xf32>
    %cst_88 = arith.constant 1.000000e+00 : f32
    %239 = vector.broadcast %cst_88 : f32 to vector<8x128xf32>
    %240 = arith.addf %238, %239 : vector<8x128xf32>
    %cst_89 = arith.constant 5.000000e-01 : f32
    %241 = vector.broadcast %cst_89 : f32 to vector<8x128xf32>
    %242 = arith.mulf %241, %240 : vector<8x128xf32>
    %243 = vector.extract_strided_slice %230 {offsets = [0, 256], sizes = [8, 128], strides = [1, 1]} : vector<8x512xf32> to vector<8x128xf32>
    %244 = math.tanh %243 : vector<8x128xf32>
    %245 = vector.extract_strided_slice %230 {offsets = [0, 384], sizes = [8, 128], strides = [1, 1]} : vector<8x512xf32> to vector<8x128xf32>
    %246 = math.tanh %245 : vector<8x128xf32>
    %cst_90 = arith.constant 1.000000e+00 : f32
    %247 = vector.broadcast %cst_90 : f32 to vector<8x128xf32>
    %248 = arith.addf %246, %247 : vector<8x128xf32>
    %cst_91 = arith.constant 5.000000e-01 : f32
    %249 = vector.broadcast %cst_91 : f32 to vector<8x128xf32>
    %250 = arith.mulf %249, %248 : vector<8x128xf32>
    %251 = arith.mulf %242, %223 : vector<8x128xf32>
    %252 = arith.mulf %236, %244 : vector<8x128xf32>
    %253 = arith.addf %251, %252 : vector<8x128xf32>
    %254 = math.tanh %253 : vector<8x128xf32>
    %255 = arith.mulf %250, %254 : vector<8x128xf32>
    %256 = arith.truncf %255 : vector<8x128xf32> to vector<8x128xbf16>
    %c0_92 = arith.constant 0 : index
    %c0_93 = arith.constant 0 : index
    %257 = vector.load %arg4[%c0_92, %c0_93] : memref<128x128xbf16, #tpu.memory_space<vmem>>, vector<128x128xbf16>
    %cst_94 = arith.constant dense<0.000000e+00> : vector<8x128xf32>
    %258 = tpu.matmul %256, %257, %cst_94 {dimension_numbers = #tpu.dot_dimension_numbers<[1], [0], [0], [1], [0, 0, 1, 1], [], []>} : vector<8x128xbf16>, vector<128x128xbf16>, vector<8x128xf32> -> vector<8x128xf32>
    %c0_95 = arith.constant 0 : index
    %c0_96 = arith.constant 0 : index
    %259 = vector.load %arg5[%c0_95, %c0_96] : memref<1x128xf32, #tpu.memory_space<vmem>>, vector<1x128xf32>
    %260 = vector.broadcast %259 : vector<1x128xf32> to vector<8x128xf32>
    %261 = arith.addf %258, %260 : vector<8x128xf32>
    %c0_97 = arith.constant 0 : index
    %c0_98 = arith.constant 0 : index
    %262 = vector.load %arg6[%c0_97, %c0_98] : memref<8x128xf32, #tpu.memory_space<vmem>>, vector<8x128xf32>
    tpu.vector_store %arg6[%c0_97, %c0_98], %261 {strides = array<i32>} : memref<8x128xf32, #tpu.memory_space<vmem>>, vector<8x128xf32>,
    return
  }
}

</mosaic_0001>

<llo_original>
// kernel: tpu_custom_call.1
$region0: #{tpu_custom_call.1}
  #allocation0 [shape = 'u32[]', space=smem, size = 0x4, offset = 0x4, fixed_abs, tag = 'smem constant byte address 0x4 - core index']
  #allocation1 [shape = 'u32[144,128]{1,0:T(1,128)}', space=vmem, size = 0x12000, scoped, tag = 'internal scratch']
  #allocation2 [shape = 'f32[64,512]{1,0:T(8,128)}', space=vmem, size = 0x20000, scoped, tag = 'scratch operand']
  %s0 = inlined_call_operand.vmem [shape: s32[64,1], index: 0, kind: input, shape index: {}]
  %s1 = inlined_call_operand.hbm [shape: bf16[64,512], index: 1, kind: input, shape index: {}]
  %s2 = inlined_call_operand.hbm [shape: bf16[128,512], index: 2, kind: input, shape index: {}]
  %s3 = inlined_call_operand.vmem [shape: f32[1,512], index: 3, kind: input, shape index: {}]
  %s4 = inlined_call_operand.vmem [shape: bf16[128,128], index: 4, kind: input, shape index: {}]
  %s5 = inlined_call_operand.vmem [shape: f32[1,128], index: 5, kind: input, shape index: {}]
  %s6 = inlined_call_operand.hbm [shape: f32[8,128], index: 6, kind: output, shape index: {}]
  %s7 = sld [smem:[#allocation0]]
  $region42: #{tpu_custom_call.1} parent=0
    _
  %s9 = ssub.s32 1, %s7
  %s10 = scalar_select 0, %s9, %s7
  $region1: #{tpu_custom_call.1} parent=0
    #allocation3 [shape = 'u8[65536]{0}', space=vmem, size = 0x10000, scoped, tag = 'input window, operand 1, single buffered']
    #allocation4 [shape = 's32[1]{0}', space=sflag, size = 0x4, scoped, tag = 'scoped memory for tpu_custom_call.1']
    #allocation5 [shape = 's32[1]{0}', space=sflag, size = 0x4, scoped, tag = 'scoped memory for tpu_custom_call.1']
    #allocation6 [shape = 'u8[131072]{0}', space=vmem, size = 0x20000, scoped, tag = 'input window, operand 2, single buffered']
    #allocation7 [shape = 's32[1]{0}', space=sflag, size = 0x4, scoped, tag = 'scoped memory for tpu_custom_call.1']
    #allocation8 [shape = 'u8[4096]{0}', space=vmem, size = 0x1000, scoped, tag = 'output window, operand 0, single buffered']
    %11 = vsyncpa [#allocation4], 0
    %12 = vsyncpa [#allocation7], 0
    %13 = vsyncpa [#allocation5], 0
    // Predicated region
    $region2: #{tpu_custom_call.1} parent=1 // pred_check
      _
    $region3: #{tpu_custom_call.1} parent=1 // pred_check_branch
      %15 = sbr.rel (0) target = $region5
    $region4: #{tpu_custom_call.1} parent=1 // pred_region
      _
    $region5: #{tpu_custom_call.1} parent=1 // pred_fallthru
      _
    // Predicated region
    $region6: #{tpu_custom_call.1} parent=1 // pred_check
      _
    $region7: #{tpu_custom_call.1} parent=1 // pred_check_branch
      %17 = sbr.rel (0) target = $region9
    $region8: #{tpu_custom_call.1} parent=1 // pred_region
      %s19 = ssub.s32 2048, 2048
      %20 = vsyncadd [#allocation4], %s19
      %s21 = sshll.u32 [#allocation3], 4
      %s22 = int_to_ptr.vmem [resolvable:$true] %s21
      %27 = dma.hbm_to_vmem [thread:$0]  %s1, 2048, %s22, [#allocation4], 256, 256, 16
    $region9: #{tpu_custom_call.1} parent=1 // pred_fallthru
      _
    // Predicated region
    $region10: #{tpu_custom_call.1} parent=1 // pred_check
      _
    $region11: #{tpu_custom_call.1} parent=1 // pred_check_branch
      %29 = sbr.rel (0) target = $region13
    $region12: #{tpu_custom_call.1} parent=1 // pred_region
      %s31 = ssub.s32 4096, 4096
      %32 = vsyncadd [#allocation7], %s31
      %s33 = sshll.u32 [#allocation6], 4
      %s34 = int_to_ptr.vmem [resolvable:$true] %s33
      %39 = dma.hbm_to_vmem [thread:$0]  %s2, 4096, %s34, [#allocation7], 256, 256, 16
    $region13: #{tpu_custom_call.1} parent=1 // pred_fallthru
      _
    // Predicated region
    $region14: #{tpu_custom_call.1} parent=1 // pred_check
      _
    $region15: #{tpu_custom_call.1} parent=1 // pred_check_branch
      %41 = sbr.rel (0) target = $region17
    $region16: #{tpu_custom_call.1} parent=1 // pred_region
      _
    $region17: #{tpu_custom_call.1} parent=1 // pred_fallthru
      _
    // Predicated region
    $region18: #{tpu_custom_call.1} parent=1 // pred_check
      _
    $region19: #{tpu_custom_call.1} parent=1 // pred_check_branch
      %43 = sbr.rel (0) target = $region21
    $region20: #{tpu_custom_call.1} parent=1 // pred_region
      _
    $region21: #{tpu_custom_call.1} parent=1 // pred_fallthru
      _
    // Predicated region
    $region22: #{tpu_custom_call.1} parent=1 // pred_check
      _
    $region23: #{tpu_custom_call.1} parent=1 // pred_check_branch
      %45 = sbr.rel (0) target = $region25
    $region24: #{tpu_custom_call.1} parent=1 // pred_region
      _
    $region25: #{tpu_custom_call.1} parent=1 // pred_fallthru
      _
    // Predicated region
    $region26: #{tpu_custom_call.1} parent=1 // pred_check
      _
    $region27: #{tpu_custom_call.1} parent=1 // pred_check_branch
      %47 = sbr.rel (0) target = $region29
    $region28: #{tpu_custom_call.1} parent=1 // pred_region
      %48 = dma.done [#allocation4], 2048
    $region29: #{tpu_custom_call.1} parent=1 // pred_fallthru
      _
    // Predicated region
    $region30: #{tpu_custom_call.1} parent=1 // pred_check
      _
    $region31: #{tpu_custom_call.1} parent=1 // pred_check_branch
      %50 = sbr.rel (0) target = $region33
    $region32: #{tpu_custom_call.1} parent=1 // pred_region
      %51 = dma.done [#allocation7], 4096
    $region33: #{tpu_custom_call.1} parent=1 // pred_fallthru
      _
    %v53 = vld [vmem:[%s0] sm:$0xff]
    %v54 = vld [vmem:[%s0 + $0x8] sm:$0xff]
    %v55 = vld [vmem:[%s0 + $0x10] sm:$0xff]
    %v56 = vld [vmem:[%s0 + $0x18] sm:$0xff]
    %v57 = vld [vmem:[%s0 + $0x20] sm:$0xff]
    %v58 = vld [vmem:[%s0 + $0x28] sm:$0xff]
    %v59 = vld [vmem:[%s0 + $0x30] sm:$0xff]
    %v60 = vld [vmem:[%s0 + $0x38] sm:$0xff]
    %v61 = vlaneseq
    %v62 = vand.u32 %v61, 127
    %63 = vset.pattern.permute.xlu0 0
    %64 = vperm.xlu0 %63, %v53
    %v65 = vpop.permute.xlu0 %64
    %66 = vset.pattern.permute.xlu0 0
    %67 = vperm.xlu0 %66, %v54
    %v68 = vpop.permute.xlu0 %67
    %69 = vset.pattern.permute.xlu0 0
    %70 = vperm.xlu0 %69, %v55
    %v71 = vpop.permute.xlu0 %70
    %72 = vset.pattern.permute.xlu0 0
    %73 = vperm.xlu0 %72, %v56
    %v74 = vpop.permute.xlu0 %73
    %75 = vset.pattern.permute.xlu0 0
    %76 = vperm.xlu0 %75, %v57
    %v77 = vpop.permute.xlu0 %76
    %78 = vset.pattern.permute.xlu0 0
    %79 = vperm.xlu0 %78, %v58
    %v80 = vpop.permute.xlu0 %79
    %81 = vset.pattern.permute.xlu0 0
    %82 = vperm.xlu0 %81, %v59
    %v83 = vpop.permute.xlu0 %82
    %84 = vset.pattern.permute.xlu0 0
    %85 = vperm.xlu0 %84, %v60
    %v86 = vpop.permute.xlu0 %85
    %vm87 = vcmp.eq.s32.totalorder %v65, %v62
    %vm88 = vcmp.eq.s32.totalorder %v68, %v62
    %vm89 = vcmp.eq.s32.totalorder %v71, %v62
    %vm90 = vcmp.eq.s32.totalorder %v74, %v62
    %vm91 = vcmp.eq.s32.totalorder %v77, %v62
    %vm92 = vcmp.eq.s32.totalorder %v80, %v62
    %vm93 = vcmp.eq.s32.totalorder %v83, %v62
    %vm94 = vcmp.eq.s32.totalorder %v86, %v62
    %v95 = vsel %vm87, 1.0, 0.0
    %v96 = vsel %vm88, 1.0, 0.0
    %v97 = vsel %vm89, 1.0, 0.0
    %v98 = vsel %vm90, 1.0, 0.0
    %v99 = vsel %vm91, 1.0, 0.0
    %v100 = vsel %vm92, 1.0, 0.0
    %v101 = vsel %vm93, 1.0, 0.0
    %v102 = vsel %vm94, 1.0, 0.0
    %v103 = vpack.c.bf16 %v96, %v95
    %v104 = vpack.c.bf16 %v98, %v97
    %v105 = vpack.c.bf16 %v100, %v99
    %v106 = vpack.c.bf16 %v102, %v101
    %v107 = vld [vmem:[#allocation3] sm:$0xff]
    %v108 = vld [vmem:[#allocation3 + $0x8] sm:$0xff]
    %v109 = vld [vmem:[#allocation3 + $0x10] sm:$0xff]
    %v110 = vld [vmem:[#allocation3 + $0x18] sm:$0xff]
    %v111 = vld [vmem:[#allocation3 + $0x20] sm:$0xff]
    %v112 = vld [vmem:[#allocation3 + $0x28] sm:$0xff]
    %v113 = vld [vmem:[#allocation3 + $0x30] sm:$0xff]
    %v114 = vld [vmem:[#allocation3 + $0x38] sm:$0xff]
    %v115 = vld [vmem:[#allocation3 + $0x40] sm:$0xff]
    %v116 = vld [vmem:[#allocation3 + $0x48] sm:$0xff]
    %v117 = vld [vmem:[#allocation3 + $0x50] sm:$0xff]
    %v118 = vld [vmem:[#allocation3 + $0x58] sm:$0xff]
    %v119 = vld [vmem:[#allocation3 + $0x60] sm:$0xff]
    %v120 = vld [vmem:[#allocation3 + $0x68] sm:$0xff]
    %v121 = vld [vmem:[#allocation3 + $0x70] sm:$0xff]
    %v122 = vld [vmem:[#allocation3 + $0x78] sm:$0xff]
    %v123 = vld [vmem:[%s3] sm:$0xf]
    %v125 = vlaneseq
    %v126 = vshrl.u32 %v125, 7
    %v127 = vsub.s32 0, %v126
    %v128 = vrot.slane %v123, %v127
    %v129 = vlaneseq
    %v130 = vshrl.u32 %v129, 7
    %v131 = vsub.s32 1, %v130
    %v132 = vrot.slane %v123, %v131
    %v133 = vlaneseq
    %v134 = vshrl.u32 %v133, 7
    %v135 = vsub.s32 2, %v134
    %v136 = vrot.slane %v123, %v135
    %v137 = vlaneseq
    %v138 = vshrl.u32 %v137, 7
    %v139 = vsub.s32 3, %v138
    %v140 = vrot.slane %v123, %v139
    %v161 = vunpack.c.l.b16 %v107
    %v162 = vunpack.c.h.b16 %v107
    %v163 = vunpack.c.l.b16 %v108
    %v164 = vunpack.c.h.b16 %v108
    %v165 = vunpack.c.l.b16 %v109
    %v166 = vunpack.c.h.b16 %v109
    %v167 = vunpack.c.l.b16 %v110
    %v168 = vunpack.c.h.b16 %v110
    %v169 = vunpack.c.l.b16 %v111
    %v170 = vunpack.c.h.b16 %v111
    %v171 = vunpack.c.l.b16 %v112
    %v172 = vunpack.c.h.b16 %v112
    %v173 = vunpack.c.l.b16 %v113
    %v174 = vunpack.c.h.b16 %v113
    %v175 = vunpack.c.l.b16 %v114
    %v176 = vunpack.c.h.b16 %v114
    %v177 = vunpack.c.l.b16 %v115
    %v178 = vunpack.c.h.b16 %v115
    %v179 = vunpack.c.l.b16 %v116
    %v180 = vunpack.c.h.b16 %v116
    %v181 = vunpack.c.l.b16 %v117
    %v182 = vunpack.c.h.b16 %v117
    %v183 = vunpack.c.l.b16 %v118
    %v184 = vunpack.c.h.b16 %v118
    %v185 = vunpack.c.l.b16 %v119
    %v186 = vunpack.c.h.b16 %v119
    %v187 = vunpack.c.l.b16 %v120
    %v188 = vunpack.c.h.b16 %v120
    %v189 = vunpack.c.l.b16 %v121
    %v190 = vunpack.c.h.b16 %v121
    %v191 = vunpack.c.l.b16 %v122
    %v192 = vunpack.c.h.b16 %v122
    %v193 = vpack.c.b16 %v165, %v161
    %v194 = vpack.c.b16 %v166, %v162
    %v195 = vpack.c.b16 %v167, %v163
    %v196 = vpack.c.b16 %v168, %v164
    %v197 = vpack.c.b16 %v173, %v169
    %v198 = vpack.c.b16 %v174, %v170
    %v199 = vpack.c.b16 %v175, %v171
    %v200 = vpack.c.b16 %v176, %v172
    %v201 = vpack.c.b16 %v181, %v177
    %v202 = vpack.c.b16 %v182, %v178
    %v203 = vpack.c.b16 %v183, %v179
    %v204 = vpack.c.b16 %v184, %v180
    %v205 = vpack.c.b16 %v189, %v185
    %v206 = vpack.c.b16 %v190, %v186
    %v207 = vpack.c.b16 %v191, %v187
    %v208 = vpack.c.b16 %v192, %v188
    %vm225 = vcmask 523264
    %v227 = vsel %vm225, %v103, 0
    %v230 = vsel %vm225, %v104, 0
    %v233 = vsel %vm225, %v105, 0
    %v236 = vsel %vm225, %v106, 0
    %238 = vmatprep.subr.bf16.mxu0 %v194
    %239 = vmatpush1.bf16.msra.mxu0 %v193
    %240 = vmatprep.subr.bf16.mxu0 %v198
    %241 = vmatpush1.bf16.msra.mxu0 %v197
    %242 = vmatprep.subr.bf16.mxu0 %v202
    %243 = vmatpush1.bf16.msra.mxu0 %v201
    %244 = vmatprep.subr.bf16.mxu0 %v206
    %245 = vmatpush1.bf16.msra.mxu0 %v205
    %246 = vmatprep.subr.bf16.mxu0 0
    %247 = vmatpush1.bf16.msra.mxu0 0
    %248 = vmatprep.subr.bf16.mxu0 0
    %249 = vmatpush1.bf16.msra.mxu0 0
    %250 = vmatprep.subr.bf16.mxu0 0
    %251 = vmatpush1.bf16.msra.mxu0 0
    %252 = vmatprep.subr.bf16.mxu0 0
    %253 = vmatpush1.bf16.msra.mxu0 0
    %254 = vmatprep.subr.bf16.mxu0 0
    %255 = vmatpush1.bf16.msra.mxu0 0
    %256 = vmatprep.subr.bf16.mxu0 0
    %257 = vmatpush1.bf16.msra.mxu0 0
    %258 = vmatprep.subr.bf16.mxu0 0
    %259 = vmatpush1.bf16.msra.mxu0 0
    %260 = vmatprep.subr.bf16.mxu0 0
    %261 = vmatpush1.bf16.msra.mxu0 0
    %262 = vmatprep.subr.bf16.mxu0 0
    %263 = vmatpush1.bf16.msra.mxu0 0
    %264 = vmatprep.subr.bf16.mxu0 0
    %265 = vmatpush1.bf16.msra.mxu0 0
    %266 = vmatprep.subr.bf16.mxu0 0
    %267 = vmatpush1.bf16.msra.mxu0 0
    %268 = vmatprep.subr.bf16.mxu0 0
    %269 = vmatpush1.bf16.msra.mxu0 0
    %270 = vmatprep.mubr.bf16.mxu0 0
    %271 = vmatmul.mubr.bf16.gmra.mrb[0].mxu0 %v227
    %v272 = vpop.f32.mrb[0].mxu0
    %v273 = vadd.f32 %v128, %v272
    %v274 = vpop.f32.mrb[0].mxu0
    %v275 = vadd.f32 %v132, %v274
    %v276 = vpop.f32.mrb[0].mxu0
    %v277 = vadd.f32 %v128, %v276
    %v278 = vpop.f32.mrb[0].mxu0
    %v279 = vadd.f32 %v132, %v278
    %280 = vmatprep.mubr.bf16.mxu0 0
    %281 = vmatmul.mubr.bf16.gmra.mrb[0].mxu0 %v230
    %v282 = vpop.f32.mrb[0].mxu0
    %v283 = vadd.f32 %v128, %v282
    %v284 = vpop.f32.mrb[0].mxu0
    %v285 = vadd.f32 %v132, %v284
    %v286 = vpop.f32.mrb[0].mxu0
    %v287 = vadd.f32 %v128, %v286
    %v288 = vpop.f32.mrb[0].mxu0
    %v289 = vadd.f32 %v132, %v288
    %290 = vmatprep.mubr.bf16.mxu0 0
    %291 = vmatmul.mubr.bf16.gmra.mrb[0].mxu0 %v233
    %v292 = vpop.f32.mrb[0].mxu0
    %v293 = vadd.f32 %v128, %v292
    %v294 = vpop.f32.mrb[0].mxu0
    %v295 = vadd.f32 %v132, %v294
    %v296 = vpop.f32.mrb[0].mxu0
    %v297 = vadd.f32 %v128, %v296
    %v298 = vpop.f32.mrb[0].mxu0
    %v299 = vadd.f32 %v132, %v298
    %300 = vmatprep.mubr.bf16.mxu0 0
    %301 = vmatmul.mubr.bf16.gmra.mrb[0].mxu0 %v236
    %v302 = vpop.f32.mrb[0].mxu0
    %v303 = vadd.f32 %v128, %v302
    %v304 = vpop.f32.mrb[0].mxu0
    %v305 = vadd.f32 %v132, %v304
    %v306 = vpop.f32.mrb[0].mxu0
    %v307 = vadd.f32 %v128, %v306
    %v308 = vpop.f32.mrb[0].mxu0
    %v309 = vadd.f32 %v132, %v308
    %310 = vdwg.mxu0
    %311 = vmatprep.subr.bf16.mxu0 %v196
    %312 = vmatpush1.bf16.msra.mxu0 %v195
    %313 = vmatprep.subr.bf16.mxu0 %v200
    %314 = vmatpush1.bf16.msra.mxu0 %v199
    %315 = vmatprep.subr.bf16.mxu0 %v204
    %316 = vmatpush1.bf16.msra.mxu0 %v203
    %317 = vmatprep.subr.bf16.mxu0 %v208
    %318 = vmatpush1.bf16.msra.mxu0 %v207
    %319 = vmatprep.subr.bf16.mxu0 0
    %320 = vmatpush1.bf16.msra.mxu0 0
    %321 = vmatprep.subr.bf16.mxu0 0
    %322 = vmatpush1.bf16.msra.mxu0 0
    %323 = vmatprep.subr.bf16.mxu0 0
    %324 = vmatpush1.bf16.msra.mxu0 0
    %325 = vmatprep.subr.bf16.mxu0 0
    %326 = vmatpush1.bf16.msra.mxu0 0
    %327 = vmatprep.subr.bf16.mxu0 0
    %328 = vmatpush1.bf16.msra.mxu0 0
    %329 = vmatprep.subr.bf16.mxu0 0
    %330 = vmatpush1.bf16.msra.mxu0 0
    %331 = vmatprep.subr.bf16.mxu0 0
    %332 = vmatpush1.bf16.msra.mxu0 0
    %333 = vmatprep.subr.bf16.mxu0 0
    %334 = vmatpush1.bf16.msra.mxu0 0
    %335 = vmatprep.subr.bf16.mxu0 0
    %336 = vmatpush1.bf16.msra.mxu0 0
    %337 = vmatprep.subr.bf16.mxu0 0
    %338 = vmatpush1.bf16.msra.mxu0 0
    %339 = vmatprep.subr.bf16.mxu0 0
    %340 = vmatpush1.bf16.msra.mxu0 0
    %341 = vmatprep.subr.bf16.mxu0 0
    %342 = vmatpush1.bf16.msra.mxu0 0
    %343 = vmatprep.mubr.bf16.mxu0 0
    %344 = vmatmul.mubr.bf16.gmra.mrb[0].mxu0 %v227
    %v345 = vpop.f32.mrb[0].mxu0
    %v346 = vadd.f32 %v136, %v345
    %v347 = vpop.f32.mrb[0].mxu0
    %v348 = vadd.f32 %v140, %v347
    %v349 = vpop.f32.mrb[0].mxu0
    %v350 = vadd.f32 %v136, %v349
    %v351 = vpop.f32.mrb[0].mxu0
    %v352 = vadd.f32 %v140, %v351
    %353 = vmatprep.mubr.bf16.mxu0 0
    %354 = vmatmul.mubr.bf16.gmra.mrb[0].mxu0 %v230
    %v355 = vpop.f32.mrb[0].mxu0
    %v356 = vadd.f32 %v136, %v355
    %v357 = vpop.f32.mrb[0].mxu0
    %v358 = vadd.f32 %v140, %v357
    %v359 = vpop.f32.mrb[0].mxu0
    %v360 = vadd.f32 %v136, %v359
    %v361 = vpop.f32.mrb[0].mxu0
    %v362 = vadd.f32 %v140, %v361
    %363 = vmatprep.mubr.bf16.mxu0 0
    %364 = vmatmul.mubr.bf16.gmra.mrb[0].mxu0 %v233
    %v365 = vpop.f32.mrb[0].mxu0
    %v366 = vadd.f32 %v136, %v365
    %v367 = vpop.f32.mrb[0].mxu0
    %v368 = vadd.f32 %v140, %v367
    %v369 = vpop.f32.mrb[0].mxu0
    %v370 = vadd.f32 %v136, %v369
    %v371 = vpop.f32.mrb[0].mxu0
    %v372 = vadd.f32 %v140, %v371
    %373 = vmatprep.mubr.bf16.mxu0 0
    %374 = vmatmul.mubr.bf16.gmra.mrb[0].mxu0 %v236
    %v375 = vpop.f32.mrb[0].mxu0
    %v376 = vadd.f32 %v136, %v375
    %v377 = vpop.f32.mrb[0].mxu0
    %v378 = vadd.f32 %v140, %v377
    %v379 = vpop.f32.mrb[0].mxu0
    %v380 = vadd.f32 %v136, %v379
    %v381 = vpop.f32.mrb[0].mxu0
    %v382 = vadd.f32 %v140, %v381
    %383 = vdwg.mxu0
    %384 = vst [vmem:[#allocation2] sm:$0xff] %v273
    %385 = vst [vmem:[#allocation2 + $0x8] sm:$0xff] %v275
    %386 = vst [vmem:[#allocation2 + $0x10] sm:$0xff] %v346
    %387 = vst [vmem:[#allocation2 + $0x18] sm:$0xff] %v348
    %388 = vst [vmem:[#allocation2 + $0x20] sm:$0xff] %v277
    %389 = vst [vmem:[#allocation2 + $0x28] sm:$0xff] %v279
    %390 = vst [vmem:[#allocation2 + $0x30] sm:$0xff] %v350
    %391 = vst [vmem:[#allocation2 + $0x38] sm:$0xff] %v352
    %392 = vst [vmem:[#allocation2 + $0x40] sm:$0xff] %v283
    %393 = vst [vmem:[#allocation2 + $0x48] sm:$0xff] %v285
    %394 = vst [vmem:[#allocation2 + $0x50] sm:$0xff] %v356
    %395 = vst [vmem:[#allocation2 + $0x58] sm:$0xff] %v358
    %396 = vst [vmem:[#allocation2 + $0x60] sm:$0xff] %v287
    %397 = vst [vmem:[#allocation2 + $0x68] sm:$0xff] %v289
    %398 = vst [vmem:[#allocation2 + $0x70] sm:$0xff] %v360
    %399 = vst [vmem:[#allocation2 + $0x78] sm:$0xff] %v362
    %400 = vst [vmem:[#allocation2 + $0x80] sm:$0xff] %v293
    %401 = vst [vmem:[#allocation2 + $0x88] sm:$0xff] %v295
    %402 = vst [vmem:[#allocation2 + $0x90] sm:$0xff] %v366
    %403 = vst [vmem:[#allocation2 + $0x98] sm:$0xff] %v368
    %404 = vst [vmem:[#allocation2 + $0xa0] sm:$0xff] %v297
    %405 = vst [vmem:[#allocation2 + $0xa8] sm:$0xff] %v299
    %406 = vst [vmem:[#allocation2 + $0xb0] sm:$0xff] %v370
    %407 = vst [vmem:[#allocation2 + $0xb8] sm:$0xff] %v372
    %408 = vst [vmem:[#allocation2 + $0xc0] sm:$0xff] %v303
    %409 = vst [vmem:[#allocation2 + $0xc8] sm:$0xff] %v305
    %410 = vst [vmem:[#allocation2 + $0xd0] sm:$0xff] %v376
    %411 = vst [vmem:[#allocation2 + $0xd8] sm:$0xff] %v378
    %412 = vst [vmem:[#allocation2 + $0xe0] sm:$0xff] %v307
    %413 = vst [vmem:[#allocation2 + $0xe8] sm:$0xff] %v309
    %414 = vst [vmem:[#allocation2 + $0xf0] sm:$0xff] %v380
    %415 = vst [vmem:[#allocation2 + $0xf8] sm:$0xff] %v382
    %v416 = vld [vmem:[#allocation2] sm:$0xff]
    %v417 = vld [vmem:[#allocation2 + $0x8] sm:$0xff]
    %v418 = vld [vmem:[#allocation2 + $0x10] sm:$0xff]
    %v419 = vld [vmem:[#allocation2 + $0x18] sm:$0xff]
    %v420 = vld [vmem:[#allocation6] sm:$0xff]
    %v421 = vld [vmem:[#allocation6 + $0x8] sm:$0xff]
    %v422 = vld [vmem:[#allocation6 + $0x10] sm:$0xff]
    %v423 = vld [vmem:[#allocation6 + $0x18] sm:$0xff]
    %v424 = vld [vmem:[#allocation6 + $0x20] sm:$0xff]
    %v425 = vld [vmem:[#allocation6 + $0x28] sm:$0xff]
    %v426 = vld [vmem:[#allocation6 + $0x30] sm:$0xff]
    %v427 = vld [vmem:[#allocation6 + $0x38] sm:$0xff]
    %v428 = vld [vmem:[#allocation6 + $0x40] sm:$0xff]
    %v429 = vld [vmem:[#allocation6 + $0x48] sm:$0xff]
    %v430 = vld [vmem:[#allocation6 + $0x50] sm:$0xff]
    %v431 = vld [vmem:[#allocation6 + $0x58] sm:$0xff]
    %v432 = vld [vmem:[#allocation6 + $0x60] sm:$0xff]
    %v433 = vld [vmem:[#allocation6 + $0x68] sm:$0xff]
    %v434 = vld [vmem:[#allocation6 + $0x70] sm:$0xff]
    %v435 = vld [vmem:[#allocation6 + $0x78] sm:$0xff]
    %v436 = vld [vmem:[#allocation6 + $0x80] sm:$0xff]
    %v437 = vld [vmem:[#allocation6 + $0x88] sm:$0xff]
    %v438 = vld [vmem:[#allocation6 + $0x90] sm:$0xff]
    %v439 = vld [vmem:[#allocation6 + $0x98] sm:$0xff]
    %v440 = vld [vmem:[#allocation6 + $0xa0] sm:$0xff]
    %v441 = vld [vmem:[#allocation6 + $0xa8] sm:$0xff]
    %v442 = vld [vmem:[#allocation6 + $0xb0] sm:$0xff]
    %v443 = vld [vmem:[#allocation6 + $0xb8] sm:$0xff]
    %v444 = vld [vmem:[#allocation6 + $0xc0] sm:$0xff]
    %v445 = vld [vmem:[#allocation6 + $0xc8] sm:$0xff]
    %v446 = vld [vmem:[#allocation6 + $0xd0] sm:$0xff]
    %v447 = vld [vmem:[#allocation6 + $0xd8] sm:$0xff]
    %v448 = vld [vmem:[#allocation6 + $0xe0] sm:$0xff]
    %v449 = vld [vmem:[#allocation6 + $0xe8] sm:$0xff]
    %v450 = vld [vmem:[#allocation6 + $0xf0] sm:$0xff]
    %v451 = vld [vmem:[#allocation6 + $0xf8] sm:$0xff]
    %v484 = vunpack.c.l.b16 %v420
    %v485 = vunpack.c.h.b16 %v420
    %v486 = vunpack.c.l.b16 %v421
    %v487 = vunpack.c.h.b16 %v421
    %v488 = vunpack.c.l.b16 %v422
    %v489 = vunpack.c.h.b16 %v422
    %v490 = vunpack.c.l.b16 %v423
    %v491 = vunpack.c.h.b16 %v423
    %v492 = vunpack.c.l.b16 %v424
    %v493 = vunpack.c.h.b16 %v424
    %v494 = vunpack.c.l.b16 %v425
    %v495 = vunpack.c.h.b16 %v425
    %v496 = vunpack.c.l.b16 %v426
    %v497 = vunpack.c.h.b16 %v426
    %v498 = vunpack.c.l.b16 %v427
    %v499 = vunpack.c.h.b16 %v427
    %v500 = vunpack.c.l.b16 %v428
    %v501 = vunpack.c.h.b16 %v428
    %v502 = vunpack.c.l.b16 %v429
    %v503 = vunpack.c.h.b16 %v429
    %v504 = vunpack.c.l.b16 %v430
    %v505 = vunpack.c.h.b16 %v430
    %v506 = vunpack.c.l.b16 %v431
    %v507 = vunpack.c.h.b16 %v431
    %v508 = vunpack.c.l.b16 %v432
    %v509 = vunpack.c.h.b16 %v432
    %v510 = vunpack.c.l.b16 %v433
    %v511 = vunpack.c.h.b16 %v433
    %v512 = vunpack.c.l.b16 %v434
    %v513 = vunpack.c.h.b16 %v434
    %v514 = vunpack.c.l.b16 %v435
    %v515 = vunpack.c.h.b16 %v435
    %v516 = vunpack.c.l.b16 %v436
    %v517 = vunpack.c.h.b16 %v436
    %v518 = vunpack.c.l.b16 %v437
    %v519 = vunpack.c.h.b16 %v437
    %v520 = vunpack.c.l.b16 %v438
    %v521 = vunpack.c.h.b16 %v438
    %v522 = vunpack.c.l.b16 %v439
    %v523 = vunpack.c.h.b16 %v439
    %v524 = vunpack.c.l.b16 %v440
    %v525 = vunpack.c.h.b16 %v440
    %v526 = vunpack.c.l.b16 %v441
    %v527 = vunpack.c.h.b16 %v441
    %v528 = vunpack.c.l.b16 %v442
    %v529 = vunpack.c.h.b16 %v442
    %v530 = vunpack.c.l.b16 %v443
    %v531 = vunpack.c.h.b16 %v443
    %v532 = vunpack.c.l.b16 %v444
    %v533 = vunpack.c.h.b16 %v444
    %v534 = vunpack.c.l.b16 %v445
    %v535 = vunpack.c.h.b16 %v445
    %v536 = vunpack.c.l.b16 %v446
    %v537 = vunpack.c.h.b16 %v446
    %v538 = vunpack.c.l.b16 %v447
    %v539 = vunpack.c.h.b16 %v447
    %v540 = vunpack.c.l.b16 %v448
    %v541 = vunpack.c.h.b16 %v448
    %v542 = vunpack.c.l.b16 %v449
    %v543 = vunpack.c.h.b16 %v449
    %v544 = vunpack.c.l.b16 %v450
    %v545 = vunpack.c.h.b16 %v450
    %v546 = vunpack.c.l.b16 %v451
    %v547 = vunpack.c.h.b16 %v451
    %v548 = vpack.c.b16 %v488, %v484
    %v549 = vpack.c.b16 %v489, %v485
    %v550 = vpack.c.b16 %v490, %v486
    %v551 = vpack.c.b16 %v491, %v487
    %v552 = vpack.c.b16 %v496, %v492
    %v553 = vpack.c.b16 %v497, %v493
    %v554 = vpack.c.b16 %v498, %v494
    %v555 = vpack.c.b16 %v499, %v495
    %v556 = vpack.c.b16 %v504, %v500
    %v557 = vpack.c.b16 %v505, %v501
    %v558 = vpack.c.b16 %v506, %v502
    %v559 = vpack.c.b16 %v507, %v503
    %v560 = vpack.c.b16 %v512, %v508
    %v561 = vpack.c.b16 %v513, %v509
    %v562 = vpack.c.b16 %v514, %v510
    %v563 = vpack.c.b16 %v515, %v511
    %v564 = vpack.c.b16 %v520, %v516
    %v565 = vpack.c.b16 %v521, %v517
    %v566 = vpack.c.b16 %v522, %v518
    %v567 = vpack.c.b16 %v523, %v519
    %v568 = vpack.c.b16 %v528, %v524
    %v569 = vpack.c.b16 %v529, %v525
    %v570 = vpack.c.b16 %v530, %v526
    %v571 = vpack.c.b16 %v531, %v527
    %v572 = vpack.c.b16 %v536, %v532
    %v573 = vpack.c.b16 %v537, %v533
    %v574 = vpack.c.b16 %v538, %v534
    %v575 = vpack.c.b16 %v539, %v535
    %v576 = vpack.c.b16 %v544, %v540
    %v577 = vpack.c.b16 %v545, %v541
    %v578 = vpack.c.b16 %v546, %v542
    %v579 = vpack.c.b16 %v547, %v543
    %612 = vmatprep.subr.bf16.mxu0 %v549
    %613 = vmatpush1.bf16.msra.mxu0 %v548
    %614 = vmatprep.subr.bf16.mxu0 %v553
    %615 = vmatpush1.bf16.msra.mxu0 %v552
    %616 = vmatprep.subr.bf16.mxu0 %v557
    %617 = vmatpush1.bf16.msra.mxu0 %v556
    %618 = vmatprep.subr.bf16.mxu0 %v561
    %619 = vmatpush1.bf16.msra.mxu0 %v560
    %620 = vmatprep.subr.bf16.mxu0 %v565
    %621 = vmatpush1.bf16.msra.mxu0 %v564
    %622 = vmatprep.subr.bf16.mxu0 %v569
    %623 = vmatpush1.bf16.msra.mxu0 %v568
    %624 = vmatprep.subr.bf16.mxu0 %v573
    %625 = vmatpush1.bf16.msra.mxu0 %v572
    %626 = vmatprep.subr.bf16.mxu0 %v577
    %627 = vmatpush1.bf16.msra.mxu0 %v576
    %628 = vmatprep.subr.bf16.mxu0 0
    %629 = vmatpush1.bf16.msra.mxu0 0
    %630 = vmatprep.subr.bf16.mxu0 0
    %631 = vmatpush1.bf16.msra.mxu0 0
    %632 = vmatprep.subr.bf16.mxu0 0
    %633 = vmatpush1.bf16.msra.mxu0 0
    %634 = vmatprep.subr.bf16.mxu0 0
    %635 = vmatpush1.bf16.msra.mxu0 0
    %636 = vmatprep.subr.bf16.mxu0 0
    %637 = vmatpush1.bf16.msra.mxu0 0
    %638 = vmatprep.subr.bf16.mxu0 0
    %639 = vmatpush1.bf16.msra.mxu0 0
    %640 = vmatprep.subr.bf16.mxu0 0
    %641 = vmatpush1.bf16.msra.mxu0 0
    %642 = vmatprep.subr.bf16.mxu0 0
    %643 = vmatpush1.bf16.msra.mxu0 0
    %644 = vmatprep.mubr.bf16.mxu0 0
    %645 = vmatmul.mubr.bf16.gmra.mrb[0].mxu0 0
    %v646 = vpop.f32.mrb[0].mxu0
    %v647 = vadd.f32 0.0, %v646
    %v648 = vpop.f32.mrb[0].mxu0
    %v649 = vadd.f32 0.0, %v648
    %v650 = vpop.f32.mrb[0].mxu0
    %v651 = vpop.f32.mrb[0].mxu0
    %652 = vdwg.mxu0
    %653 = vmatprep.subr.bf16.mxu0 %v551
    %654 = vmatpush1.bf16.msra.mxu0 %v550
    %655 = vmatprep.subr.bf16.mxu0 %v555
    %656 = vmatpush1.bf16.msra.mxu0 %v554
    %657 = vmatprep.subr.bf16.mxu0 %v559
    %658 = vmatpush1.bf16.msra.mxu0 %v558
    %659 = vmatprep.subr.bf16.mxu0 %v563
    %660 = vmatpush1.bf16.msra.mxu0 %v562
    %661 = vmatprep.subr.bf16.mxu0 %v567
    %662 = vmatpush1.bf16.msra.mxu0 %v566
    %663 = vmatprep.subr.bf16.mxu0 %v571
    %664 = vmatpush1.bf16.msra.mxu0 %v570
    %665 = vmatprep.subr.bf16.mxu0 %v575
    %666 = vmatpush1.bf16.msra.mxu0 %v574
    %667 = vmatprep.subr.bf16.mxu0 %v579
    %668 = vmatpush1.bf16.msra.mxu0 %v578
    %669 = vmatprep.subr.bf16.mxu0 0
    %670 = vmatpush1.bf16.msra.mxu0 0
    %671 = vmatprep.subr.bf16.mxu0 0
    %672 = vmatpush1.bf16.msra.mxu0 0
    %673 = vmatprep.subr.bf16.mxu0 0
    %674 = vmatpush1.bf16.msra.mxu0 0
    %675 = vmatprep.subr.bf16.mxu0 0
    %676 = vmatpush1.bf16.msra.mxu0 0
    %677 = vmatprep.subr.bf16.mxu0 0
    %678 = vmatpush1.bf16.msra.mxu0 0
    %679 = vmatprep.subr.bf16.mxu0 0
    %680 = vmatpush1.bf16.msra.mxu0 0
    %681 = vmatprep.subr.bf16.mxu0 0
    %682 = vmatpush1.bf16.msra.mxu0 0
    %683 = vmatprep.subr.bf16.mxu0 0
    %684 = vmatpush1.bf16.msra.mxu0 0
    %685 = vmatprep.mubr.bf16.mxu0 0
    %686 = vmatmul.mubr.bf16.gmra.mrb[0].mxu0 0
    %v687 = vpop.f32.mrb[0].mxu0
    %v688 = vadd.f32 0.0, %v687
    %v689 = vpop.f32.mrb[0].mxu0
    %v690 = vadd.f32 0.0, %v689
    %v691 = vpop.f32.mrb[0].mxu0
    %v692 = vpop.f32.mrb[0].mxu0
    %693 = vdwg.mxu0
    %v694 = vadd.f32 %v416, %v647
    %v695 = vadd.f32 %v417, %v649
    %v696 = vadd.f32 %v418, %v688
    %v697 = vadd.f32 %v419, %v690
    %v698 = vtanh.pop %v694
    %v699 = vadd.f32 %v698, 1.0
    %v700 = vmul.f32 %v699, 0.5
    %v701 = vtanh.pop %v695
    %v702 = vadd.f32 %v701, 1.0
    %v703 = vmul.f32 %v702, 0.5
    %v704 = vtanh.pop %v696
    %v705 = vtanh.pop %v697
    %v706 = vadd.f32 %v705, 1.0
    %v707 = vmul.f32 %v706, 0.5
    %v708 = vmul.f32 %v703, 0.0
    %v709 = vmul.f32 %v700, %v704
    %v710 = vadd.f32 %v708, %v709
    %v711 = vtanh.pop %v710
    %v712 = vmul.f32 %v707, %v711
    %v713 = vld [vmem:[#allocation2 + $0x20] sm:$0xff]
    %v714 = vld [vmem:[#allocation2 + $0x28] sm:$0xff]
    %v715 = vld [vmem:[#allocation2 + $0x30] sm:$0xff]
    %v716 = vld [vmem:[#allocation2 + $0x38] sm:$0xff]
    %v717 = vpack.c.bf16 %v712, %v712
    %718 = vmatprep.subr.bf16.mxu0 %v549
    %719 = vmatpush1.bf16.msra.mxu0 %v548
    %720 = vmatprep.subr.bf16.mxu0 %v553
    %721 = vmatpush1.bf16.msra.mxu0 %v552
    %722 = vmatprep.subr.bf16.mxu0 %v557
    %723 = vmatpush1.bf16.msra.mxu0 %v556
    %724 = vmatprep.subr.bf16.mxu0 %v561
    %725 = vmatpush1.bf16.msra.mxu0 %v560
    %726 = vmatprep.subr.bf16.mxu0 %v565
    %727 = vmatpush1.bf16.msra.mxu0 %v564
    %728 = vmatprep.subr.bf16.mxu0 %v569
    %729 = vmatpush1.bf16.msra.mxu0 %v568
    %730 = vmatprep.subr.bf16.mxu0 %v573
    %731 = vmatpush1.bf16.msra.mxu0 %v572
    %732 = vmatprep.subr.bf16.mxu0 %v577
    %733 = vmatpush1.bf16.msra.mxu0 %v576
    %734 = vmatprep.subr.bf16.mxu0 0
    %735 = vmatpush1.bf16.msra.mxu0 0
    %736 = vmatprep.subr.bf16.mxu0 0
    %737 = vmatpush1.bf16.msra.mxu0 0
    %738 = vmatprep.subr.bf16.mxu0 0
    %739 = vmatpush1.bf16.msra.mxu0 0
    %740 = vmatprep.subr.bf16.mxu0 0
    %741 = vmatpush1.bf16.msra.mxu0 0
    %742 = vmatprep.subr.bf16.mxu0 0
    %743 = vmatpush1.bf16.msra.mxu0 0
    %744 = vmatprep.subr.bf16.mxu0 0
    %745 = vmatpush1.bf16.msra.mxu0 0
    %746 = vmatprep.subr.bf16.mxu0 0
    %747 = vmatpush1.bf16.msra.mxu0 0
    %748 = vmatprep.subr.bf16.mxu0 0
    %749 = vmatpush1.bf16.msra.mxu0 0
    %750 = vmatprep.mubr.bf16.mxu0 0
    %751 = vmatmul.mubr.bf16.gmra.mrb[0].mxu0 %v717
    %v752 = vpop.f32.mrb[0].mxu0
    %v753 = vadd.f32 0.0, %v752
    %v754 = vpop.f32.mrb[0].mxu0
    %v755 = vadd.f32 0.0, %v754
    %v756 = vpop.f32.mrb[0].mxu0
    %v757 = vpop.f32.mrb[0].mxu0
    %758 = vdwg.mxu0
    %759 = vmatprep.subr.bf16.mxu0 %v551
    %760 = vmatpush1.bf16.msra.mxu0 %v550
    %761 = vmatprep.subr.bf16.mxu0 %v555
    %762 = vmatpush1.bf16.msra.mxu0 %v554
    %763 = vmatprep.subr.bf16.mxu0 %v559
    %764 = vmatpush1.bf16.msra.mxu0 %v558
    %765 = vmatprep.subr.bf16.mxu0 %v563
    %766 = vmatpush1.bf16.msra.mxu0 %v562
    %767 = vmatprep.subr.bf16.mxu0 %v567
    %768 = vmatpush1.bf16.msra.mxu0 %v566
    %769 = vmatprep.subr.bf16.mxu0 %v571
    %770 = vmatpush1.bf16.msra.mxu0 %v570
    %771 = vmatprep.subr.bf16.mxu0 %v575
    %772 = vmatpush1.bf16.msra.mxu0 %v574
    %773 = vmatprep.subr.bf16.mxu0 %v579
    %774 = vmatpush1.bf16.msra.mxu0 %v578
    %775 = vmatprep.subr.bf16.mxu0 0
    %776 = vmatpush1.bf16.msra.mxu0 0
    %777 = vmatprep.subr.bf16.mxu0 0
    %778 = vmatpush1.bf16.msra.mxu0 0
    %779 = vmatprep.subr.bf16.mxu0 0
    %780 = vmatpush1.bf16.msra.mxu0 0
    %781 = vmatprep.subr.bf16.mxu0 0
    %782 = vmatpush1.bf16.msra.mxu0 0
    %783 = vmatprep.subr.bf16.mxu0 0
    %784 = vmatpush1.bf16.msra.mxu0 0
    %785 = vmatprep.subr.bf16.mxu0 0
    %786 = vmatpush1.bf16.msra.mxu0 0
    %787 = vmatprep.subr.bf16.mxu0 0
    %788 = vmatpush1.bf16.msra.mxu0 0
    %789 = vmatprep.subr.bf16.mxu0 0
    %790 = vmatpush1.bf16.msra.mxu0 0
    %791 = vmatprep.mubr.bf16.mxu0 0
    %792 = vmatmul.mubr.bf16.gmra.mrb[0].mxu0 %v717
    %v793 = vpop.f32.mrb[0].mxu0
    %v794 = vadd.f32 0.0, %v793
    %v795 = vpop.f32.mrb[0].mxu0
    %v796 = vadd.f32 0.0, %v795
    %v797 = vpop.f32.mrb[0].mxu0
    %v798 = vpop.f32.mrb[0].mxu0
    %799 = vdwg.mxu0
    %v800 = vadd.f32 %v713, %v753
    %v801 = vadd.f32 %v714, %v755
    %v802 = vadd.f32 %v715, %v794
    %v803 = vadd.f32 %v716, %v796
    %v804 = vtanh.pop %v800
    %v805 = vadd.f32 %v804, 1.0
    %v806 = vmul.f32 %v805, 0.5
    %v807 = vtanh.pop %v801
    %v808 = vadd.f32 %v807, 1.0
    %v809 = vmul.f32 %v808, 0.5
    %v810 = vtanh.pop %v802
    %v811 = vtanh.pop %v803
    %v812 = vadd.f32 %v811, 1.0
    %v813 = vmul.f32 %v812, 0.5
    %v814 = vmul.f32 %v809, %v710
    %v815 = vmul.f32 %v806, %v810
    %v816 = vadd.f32 %v814, %v815
    %v817 = vtanh.pop %v816
    %v818 = vmul.f32 %v813, %v817
    %v819 = vld [vmem:[#allocation2 + $0x40] sm:$0xff]
    %v820 = vld [vmem:[#allocation2 + $0x48] sm:$0xff]
    %v821 = vld [vmem:[#allocation2 + $0x50] sm:$0xff]
    %v822 = vld [vmem:[#allocation2 + $0x58] sm:$0xff]
    %v823 = vpack.c.bf16 %v818, %v818
    %824 = vmatprep.subr.bf16.mxu0 %v549
    %825 = vmatpush1.bf16.msra.mxu0 %v548
    %826 = vmatprep.subr.bf16.mxu0 %v553
    %827 = vmatpush1.bf16.msra.mxu0 %v552
    %828 = vmatprep.subr.bf16.mxu0 %v557
    %829 = vmatpush1.bf16.msra.mxu0 %v556
    %830 = vmatprep.subr.bf16.mxu0 %v561
    %831 = vmatpush1.bf16.msra.mxu0 %v560
    %832 = vmatprep.subr.bf16.mxu0 %v565
    %833 = vmatpush1.bf16.msra.mxu0 %v564
    %834 = vmatprep.subr.bf16.mxu0 %v569
    %835 = vmatpush1.bf16.msra.mxu0 %v568
    %836 = vmatprep.subr.bf16.mxu0 %v573
    %837 = vmatpush1.bf16.msra.mxu0 %v572
    %838 = vmatprep.subr.bf16.mxu0 %v577
    %839 = vmatpush1.bf16.msra.mxu0 %v576
    %840 = vmatprep.subr.bf16.mxu0 0
    %841 = vmatpush1.bf16.msra.mxu0 0
    %842 = vmatprep.subr.bf16.mxu0 0
    %843 = vmatpush1.bf16.msra.mxu0 0
    %844 = vmatprep.subr.bf16.mxu0 0
    %845 = vmatpush1.bf16.msra.mxu0 0
    %846 = vmatprep.subr.bf16.mxu0 0
    %847 = vmatpush1.bf16.msra.mxu0 0
    %848 = vmatprep.subr.bf16.mxu0 0
    %849 = vmatpush1.bf16.msra.mxu0 0
    %850 = vmatprep.subr.bf16.mxu0 0
    %851 = vmatpush1.bf16.msra.mxu0 0
    %852 = vmatprep.subr.bf16.mxu0 0
    %853 = vmatpush1.bf16.msra.mxu0 0
    %854 = vmatprep.subr.bf16.mxu0 0
    %855 = vmatpush1.bf16.msra.mxu0 0
    %856 = vmatprep.mubr.bf16.mxu0 0
    %857 = vmatmul.mubr.bf16.gmra.mrb[0].mxu0 %v823
    %v858 = vpop.f32.mrb[0].mxu0
    %v859 = vadd.f32 0.0, %v858
    %v860 = vpop.f32.mrb[0].mxu0
    %v861 = vadd.f32 0.0, %v860
    %v862 = vpop.f32.mrb[0].mxu0
    %v863 = vpop.f32.mrb[0].mxu0
    %864 = vdwg.mxu0
    %865 = vmatprep.subr.bf16.mxu0 %v551
    %866 = vmatpush1.bf16.msra.mxu0 %v550
    %867 = vmatprep.subr.bf16.mxu0 %v555
    %868 = vmatpush1.bf16.msra.mxu0 %v554
    %869 = vmatprep.subr.bf16.mxu0 %v559
    %870 = vmatpush1.bf16.msra.mxu0 %v558
    %871 = vmatprep.subr.bf16.mxu0 %v563
    %872 = vmatpush1.bf16.msra.mxu0 %v562
    %873 = vmatprep.subr.bf16.mxu0 %v567
    %874 = vmatpush1.bf16.msra.mxu0 %v566
    %875 = vmatprep.subr.bf16.mxu0 %v571
    %876 = vmatpush1.bf16.msra.mxu0 %v570
    %877 = vmatprep.subr.bf16.mxu0 %v575
    %878 = vmatpush1.bf16.msra.mxu0 %v574
    %879 = vmatprep.subr.bf16.mxu0 %v579
    %880 = vmatpush1.bf16.msra.mxu0 %v578
    %881 = vmatprep.subr.bf16.mxu0 0
    %882 = vmatpush1.bf16.msra.mxu0 0
    %883 = vmatprep.subr.bf16.mxu0 0
    %884 = vmatpush1.bf16.msra.mxu0 0
    %885 = vmatprep.subr.bf16.mxu0 0
    %886 = vmatpush1.bf16.msra.mxu0 0
    %887 = vmatprep.subr.bf16.mxu0 0
    %888 = vmatpush1.bf16.msra.mxu0 0
    %889 = vmatprep.subr.bf16.mxu0 0
    %890 = vmatpush1.bf16.msra.mxu0 0
    %891 = vmatprep.subr.bf16.mxu0 0
    %892 = vmatpush1.bf16.msra.mxu0 0
    %893 = vmatprep.subr.bf16.mxu0 0
    %894 = vmatpush1.bf16.msra.mxu0 0
    %895 = vmatprep.subr.bf16.mxu0 0
    %896 = vmatpush1.bf16.msra.mxu0 0
    %897 = vmatprep.mubr.bf16.mxu0 0
    %898 = vmatmul.mubr.bf16.gmra.mrb[0].mxu0 %v823
    %v899 = vpop.f32.mrb[0].mxu0
    %v900 = vadd.f32 0.0, %v899
    %v901 = vpop.f32.mrb[0].mxu0
    %v902 = vadd.f32 0.0, %v901
    %v903 = vpop.f32.mrb[0].mxu0
    %v904 = vpop.f32.mrb[0].mxu0
    %905 = vdwg.mxu0
    %v906 = vadd.f32 %v819, %v859
    %v907 = vadd.f32 %v820, %v861
    %v908 = vadd.f32 %v821, %v900
    %v909 = vadd.f32 %v822, %v902
    %v910 = vtanh.pop %v906
    %v911 = vadd.f32 %v910, 1.0
    %v912 = vmul.f32 %v911, 0.5
    %v913 = vtanh.pop %v907
    %v914 = vadd.f32 %v913, 1.0
    %v915 = vmul.f32 %v914, 0.5
    %v916 = vtanh.pop %v908
    %v917 = vtanh.pop %v909
    %v918 = vadd.f32 %v917, 1.0
    %v919 = vmul.f32 %v918, 0.5
    %v920 = vmul.f32 %v915, %v816
    %v921 = vmul.f32 %v912, %v916
    %v922 = vadd.f32 %v920, %v921
    %v923 = vtanh.pop %v922
    %v924 = vmul.f32 %v919, %v923
    %v925 = vld [vmem:[#allocation2 + $0x60] sm:$0xff]
    %v926 = vld [vmem:[#allocation2 + $0x68] sm:$0xff]
    %v927 = vld [vmem:[#allocation2 + $0x70] sm:$0xff]
    %v928 = vld [vmem:[#allocation2 + $0x78] sm:$0xff]
    %v929 = vpack.c.bf16 %v924, %v924
    %930 = vmatprep.subr.bf16.mxu0 %v549
    %931 = vmatpush1.bf16.msra.mxu0 %v548
    %932 = vmatprep.subr.bf16.mxu0 %v553
    %933 = vmatpush1.bf16.msra.mxu0 %v552
    %934 = vmatprep.subr.bf16.mxu0 %v557
    %935 = vmatpush1.bf16.msra.mxu0 %v556
    %936 = vmatprep.subr.bf16.mxu0 %v561
    %937 = vmatpush1.bf16.msra.mxu0 %v560
    %938 = vmatprep.subr.bf16.mxu0 %v565
    %939 = vmatpush1.bf16.msra.mxu0 %v564
    %940 = vmatprep.subr.bf16.mxu0 %v569
    %941 = vmatpush1.bf16.msra.mxu0 %v568
    %942 = vmatprep.subr.bf16.mxu0 %v573
    %943 = vmatpush1.bf16.msra.mxu0 %v572
    %944 = vmatprep.subr.bf16.mxu0 %v577
    %945 = vmatpush1.bf16.msra.mxu0 %v576
    %946 = vmatprep.subr.bf16.mxu0 0
    %947 = vmatpush1.bf16.msra.mxu0 0
    %948 = vmatprep.subr.bf16.mxu0 0
    %949 = vmatpush1.bf16.msra.mxu0 0
    %950 = vmatprep.subr.bf16.mxu0 0
    %951 = vmatpush1.bf16.msra.mxu0 0
    %952 = vmatprep.subr.bf16.mxu0 0
    %953 = vmatpush1.bf16.msra.mxu0 0
    %954 = vmatprep.subr.bf16.mxu0 0
    %955 = vmatpush1.bf16.msra.mxu0 0
    %956 = vmatprep.subr.bf16.mxu0 0
    %957 = vmatpush1.bf16.msra.mxu0 0
    %958 = vmatprep.subr.bf16.mxu0 0
    %959 = vmatpush1.bf16.msra.mxu0 0
    %960 = vmatprep.subr.bf16.mxu0 0
    %961 = vmatpush1.bf16.msra.mxu0 0
    %962 = vmatprep.mubr.bf16.mxu0 0
    %963 = vmatmul.mubr.bf16.gmra.mrb[0].mxu0 %v929
    %v964 = vpop.f32.mrb[0].mxu0
    %v965 = vadd.f32 0.0, %v964
    %v966 = vpop.f32.mrb[0].mxu0
    %v967 = vadd.f32 0.0, %v966
    %v968 = vpop.f32.mrb[0].mxu0
    %v969 = vpop.f32.mrb[0].mxu0
    %970 = vdwg.mxu0
    %971 = vmatprep.subr.bf16.mxu0 %v551
    %972 = vmatpush1.bf16.msra.mxu0 %v550
    %973 = vmatprep.subr.bf16.mxu0 %v555
    %974 = vmatpush1.bf16.msra.mxu0 %v554
    %975 = vmatprep.subr.bf16.mxu0 %v559
    %976 = vmatpush1.bf16.msra.mxu0 %v558
    %977 = vmatprep.subr.bf16.mxu0 %v563
    %978 = vmatpush1.bf16.msra.mxu0 %v562
    %979 = vmatprep.subr.bf16.mxu0 %v567
    %980 = vmatpush1.bf16.msra.mxu0 %v566
    %981 = vmatprep.subr.bf16.mxu0 %v571
    %982 = vmatpush1.bf16.msra.mxu0 %v570
    %983 = vmatprep.subr.bf16.mxu0 %v575
    %984 = vmatpush1.bf16.msra.mxu0 %v574
    %985 = vmatprep.subr.bf16.mxu0 %v579
    %986 = vmatpush1.bf16.msra.mxu0 %v578
    %987 = vmatprep.subr.bf16.mxu0 0
    %988 = vmatpush1.bf16.msra.mxu0 0
    %989 = vmatprep.subr.bf16.mxu0 0
    %990 = vmatpush1.bf16.msra.mxu0 0
    %991 = vmatprep.subr.bf16.mxu0 0
    %992 = vmatpush1.bf16.msra.mxu0 0
    %993 = vmatprep.subr.bf16.mxu0 0
    %994 = vmatpush1.bf16.msra.mxu0 0
    %995 = vmatprep.subr.bf16.mxu0 0
    %996 = vmatpush1.bf16.msra.mxu0 0
    %997 = vmatprep.subr.bf16.mxu0 0
    %998 = vmatpush1.bf16.msra.mxu0 0
    %999 = vmatprep.subr.bf16.mxu0 0
    %1000 = vmatpush1.bf16.msra.mxu0 0
    %1001 = vmatprep.subr.bf16.mxu0 0
    %1002 = vmatpush1.bf16.msra.mxu0 0
    %1003 = vmatprep.mubr.bf16.mxu0 0
    %1004 = vmatmul.mubr.bf16.gmra.mrb[0].mxu0 %v929
    %v1005 = vpop.f32.mrb[0].mxu0
    %v1006 = vadd.f32 0.0, %v1005
    %v1007 = vpop.f32.mrb[0].mxu0
    %v1008 = vadd.f32 0.0, %v1007
    %v1009 = vpop.f32.mrb[0].mxu0
    %v1010 = vpop.f32.mrb[0].mxu0
    %1011 = vdwg.mxu0
    %v1012 = vadd.f32 %v925, %v965
    %v1013 = vadd.f32 %v926, %v967
    %v1014 = vadd.f32 %v927, %v1006
    %v1015 = vadd.f32 %v928, %v1008
    %v1016 = vtanh.pop %v1012
    %v1017 = vadd.f32 %v1016, 1.0
    %v1018 = vmul.f32 %v1017, 0.5
    %v1019 = vtanh.pop %v1013
    %v1020 = vadd.f32 %v1019, 1.0
    %v1021 = vmul.f32 %v1020, 0.5
    %v1022 = vtanh.pop %v1014
    %v1023 = vtanh.pop %v1015
    %v1024 = vadd.f32 %v1023, 1.0
    %v1025 = vmul.f32 %v1024, 0.5
    %v1026 = vmul.f32 %v1021, %v922
    %v1027 = vmul.f32 %v1018, %v1022
    %v1028 = vadd.f32 %v1026, %v1027
    %v1029 = vtanh.pop %v1028
    %v1030 = vmul.f32 %v1025, %v1029
    %v1031 = vld [vmem:[#allocation2 + $0x80] sm:$0xff]
    %v1032 = vld [vmem:[#allocation2 + $0x88] sm:$0xff]
    %v1033 = vld [vmem:[#allocation2 + $0x90] sm:$0xff]
    %v1034 = vld [vmem:[#allocation2 + $0x98] sm:$0xff]
    %v1035 = vpack.c.bf16 %v1030, %v1030
    %1036 = vmatprep.subr.bf16.mxu0 %v549
    %1037 = vmatpush1.bf16.msra.mxu0 %v548
    %1038 = vmatprep.subr.bf16.mxu0 %v553
    %1039 = vmatpush1.bf16.msra.mxu0 %v552
    %1040 = vmatprep.subr.bf16.mxu0 %v557
    %1041 = vmatpush1.bf16.msra.mxu0 %v556
    %1042 = vmatprep.subr.bf16.mxu0 %v561
    %1043 = vmatpush1.bf16.msra.mxu0 %v560
    %1044 = vmatprep.subr.bf16.mxu0 %v565
    %1045 = vmatpush1.bf16.msra.mxu0 %v564
    %1046 = vmatprep.subr.bf16.mxu0 %v569
    %1047 = vmatpush1.bf16.msra.mxu0 %v568
    %1048 = vmatprep.subr.bf16.mxu0 %v573
    %1049 = vmatpush1.bf16.msra.mxu0 %v572
    %1050 = vmatprep.subr.bf16.mxu0 %v577
    %1051 = vmatpush1.bf16.msra.mxu0 %v576
    %1052 = vmatprep.subr.bf16.mxu0 0
    %1053 = vmatpush1.bf16.msra.mxu0 0
    %1054 = vmatprep.subr.bf16.mxu0 0
    %1055 = vmatpush1.bf16.msra.mxu0 0
    %1056 = vmatprep.subr.bf16.mxu0 0
    %1057 = vmatpush1.bf16.msra.mxu0 0
    %1058 = vmatprep.subr.bf16.mxu0 0
    %1059 = vmatpush1.bf16.msra.mxu0 0
    %1060 = vmatprep.subr.bf16.mxu0 0
    %1061 = vmatpush1.bf16.msra.mxu0 0
    %1062 = vmatprep.subr.bf16.mxu0 0
    %1063 = vmatpush1.bf16.msra.mxu0 0
    %1064 = vmatprep.subr.bf16.mxu0 0
    %1065 = vmatpush1.bf16.msra.mxu0 0
    %1066 = vmatprep.subr.bf16.mxu0 0
    %1067 = vmatpush1.bf16.msra.mxu0 0
    %1068 = vmatprep.mubr.bf16.mxu0 0
    %1069 = vmatmul.mubr.bf16.gmra.mrb[0].mxu0 %v1035
    %v1070 = vpop.f32.mrb[0].mxu0
    %v1071 = vadd.f32 0.0, %v1070
    %v1072 = vpop.f32.mrb[0].mxu0
    %v1073 = vadd.f32 0.0, %v1072
    %v1074 = vpop.f32.mrb[0].mxu0
    %v1075 = vpop.f32.mrb[0].mxu0
    %1076 = vdwg.mxu0
    %1077 = vmatprep.subr.bf16.mxu0 %v551
    %1078 = vmatpush1.bf16.msra.mxu0 %v550
    %1079 = vmatprep.subr.bf16.mxu0 %v555
    %1080 = vmatpush1.bf16.msra.mxu0 %v554
    %1081 = vmatprep.subr.bf16.mxu0 %v559
    %1082 = vmatpush1.bf16.msra.mxu0 %v558
    %1083 = vmatprep.subr.bf16.mxu0 %v563
    %1084 = vmatpush1.bf16.msra.mxu0 %v562
    %1085 = vmatprep.subr.bf16.mxu0 %v567
    %1086 = vmatpush1.bf16.msra.mxu0 %v566
    %1087 = vmatprep.subr.bf16.mxu0 %v571
    %1088 = vmatpush1.bf16.msra.mxu0 %v570
    %1089 = vmatprep.subr.bf16.mxu0 %v575
    %1090 = vmatpush1.bf16.msra.mxu0 %v574
    %1091 = vmatprep.subr.bf16.mxu0 %v579
    %1092 = vmatpush1.bf16.msra.mxu0 %v578
    %1093 = vmatprep.subr.bf16.mxu0 0
    %1094 = vmatpush1.bf16.msra.mxu0 0
    %1095 = vmatprep.subr.bf16.mxu0 0
    %1096 = vmatpush1.bf16.msra.mxu0 0
    %1097 = vmatprep.subr.bf16.mxu0 0
    %1098 = vmatpush1.bf16.msra.mxu0 0
    %1099 = vmatprep.subr.bf16.mxu0 0
    %1100 = vmatpush1.bf16.msra.mxu0 0
    %1101 = vmatprep.subr.bf16.mxu0 0
    %1102 = vmatpush1.bf16.msra.mxu0 0
    %1103 = vmatprep.subr.bf16.mxu0 0
    %1104 = vmatpush1.bf16.msra.mxu0 0
    %1105 = vmatprep.subr.bf16.mxu0 0
    %1106 = vmatpush1.bf16.msra.mxu0 0
    %1107 = vmatprep.subr.bf16.mxu0 0
    %1108 = vmatpush1.bf16.msra.mxu0 0
    %1109 = vmatprep.mubr.bf16.mxu0 0
    %1110 = vmatmul.mubr.bf16.gmra.mrb[0].mxu0 %v1035
    %v1111 = vpop.f32.mrb[0].mxu0
    %v1112 = vadd.f32 0.0, %v1111
    %v1113 = vpop.f32.mrb[0].mxu0
    %v1114 = vadd.f32 0.0, %v1113
    %v1115 = vpop.f32.mrb[0].mxu0
    %v1116 = vpop.f32.mrb[0].mxu0
    %1117 = vdwg.mxu0
    %v1118 = vadd.f32 %v1031, %v1071
    %v1119 = vadd.f32 %v1032, %v1073
    %v1120 = vadd.f32 %v1033, %v1112
    %v1121 = vadd.f32 %v1034, %v1114
    %v1122 = vtanh.pop %v1118
    %v1123 = vadd.f32 %v1122, 1.0
    %v1124 = vmul.f32 %v1123, 0.5
    %v1125 = vtanh.pop %v1119
    %v1126 = vadd.f32 %v1125, 1.0
    %v1127 = vmul.f32 %v1126, 0.5
    %v1128 = vtanh.pop %v1120
    %v1129 = vtanh.pop %v1121
    %v1130 = vadd.f32 %v1129, 1.0
    %v1131 = vmul.f32 %v1130, 0.5
    %v1132 = vmul.f32 %v1127, %v1028
    %v1133 = vmul.f32 %v1124, %v1128
    %v1134 = vadd.f32 %v1132, %v1133
    %v1135 = vtanh.pop %v1134
    %v1136 = vmul.f32 %v1131, %v1135
    %v1137 = vld [vmem:[#allocation2 + $0xa0] sm:$0xff]
    %v1138 = vld [vmem:[#allocation2 + $0xa8] sm:$0xff]
    %v1139 = vld [vmem:[#allocation2 + $0xb0] sm:$0xff]
    %v1140 = vld [vmem:[#allocation2 + $0xb8] sm:$0xff]
    %v1141 = vpack.c.bf16 %v1136, %v1136
    %1142 = vmatprep.subr.bf16.mxu0 %v549
    %1143 = vmatpush1.bf16.msra.mxu0 %v548
    %1144 = vmatprep.subr.bf16.mxu0 %v553
    %1145 = vmatpush1.bf16.msra.mxu0 %v552
    %1146 = vmatprep.subr.bf16.mxu0 %v557
    %1147 = vmatpush1.bf16.msra.mxu0 %v556
    %1148 = vmatprep.subr.bf16.mxu0 %v561
    %1149 = vmatpush1.bf16.msra.mxu0 %v560
    %1150 = vmatprep.subr.bf16.mxu0 %v565
    %1151 = vmatpush1.bf16.msra.mxu0 %v564
    %1152 = vmatprep.subr.bf16.mxu0 %v569
    %1153 = vmatpush1.bf16.msra.mxu0 %v568
    %1154 = vmatprep.subr.bf16.mxu0 %v573
    %1155 = vmatpush1.bf16.msra.mxu0 %v572
    %1156 = vmatprep.subr.bf16.mxu0 %v577
    %1157 = vmatpush1.bf16.msra.mxu0 %v576
    %1158 = vmatprep.subr.bf16.mxu0 0
    %1159 = vmatpush1.bf16.msra.mxu0 0
    %1160 = vmatprep.subr.bf16.mxu0 0
    %1161 = vmatpush1.bf16.msra.mxu0 0
    %1162 = vmatprep.subr.bf16.mxu0 0
    %1163 = vmatpush1.bf16.msra.mxu0 0
    %1164 = vmatprep.subr.bf16.mxu0 0
    %1165 = vmatpush1.bf16.msra.mxu0 0
    %1166 = vmatprep.subr.bf16.mxu0 0
    %1167 = vmatpush1.bf16.msra.mxu0 0
    %1168 = vmatprep.subr.bf16.mxu0 0
    %1169 = vmatpush1.bf16.msra.mxu0 0
    %1170 = vmatprep.subr.bf16.mxu0 0
    %1171 = vmatpush1.bf16.msra.mxu0 0
    %1172 = vmatprep.subr.bf16.mxu0 0
    %1173 = vmatpush1.bf16.msra.mxu0 0
    %1174 = vmatprep.mubr.bf16.mxu0 0
    %1175 = vmatmul.mubr.bf16.gmra.mrb[0].mxu0 %v1141
    %v1176 = vpop.f32.mrb[0].mxu0
    %v1177 = vadd.f32 0.0, %v1176
    %v1178 = vpop.f32.mrb[0].mxu0
    %v1179 = vadd.f32 0.0, %v1178
    %v1180 = vpop.f32.mrb[0].mxu0
    %v1181 = vpop.f32.mrb[0].mxu0
    %1182 = vdwg.mxu0
    %1183 = vmatprep.subr.bf16.mxu0 %v551
    %1184 = vmatpush1.bf16.msra.mxu0 %v550
    %1185 = vmatprep.subr.bf16.mxu0 %v555
    %1186 = vmatpush1.bf16.msra.mxu0 %v554
    %1187 = vmatprep.subr.bf16.mxu0 %v559
    %1188 = vmatpush1.bf16.msra.mxu0 %v558
    %1189 = vmatprep.subr.bf16.mxu0 %v563
    %1190 = vmatpush1.bf16.msra.mxu0 %v562
    %1191 = vmatprep.subr.bf16.mxu0 %v567
    %1192 = vmatpush1.bf16.msra.mxu0 %v566
    %1193 = vmatprep.subr.bf16.mxu0 %v571
    %1194 = vmatpush1.bf16.msra.mxu0 %v570
    %1195 = vmatprep.subr.bf16.mxu0 %v575
    %1196 = vmatpush1.bf16.msra.mxu0 %v574
    %1197 = vmatprep.subr.bf16.mxu0 %v579
    %1198 = vmatpush1.bf16.msra.mxu0 %v578
    %1199 = vmatprep.subr.bf16.mxu0 0
    %1200 = vmatpush1.bf16.msra.mxu0 0
    %1201 = vmatprep.subr.bf16.mxu0 0
    %1202 = vmatpush1.bf16.msra.mxu0 0
    %1203 = vmatprep.subr.bf16.mxu0 0
    %1204 = vmatpush1.bf16.msra.mxu0 0
    %1205 = vmatprep.subr.bf16.mxu0 0
    %1206 = vmatpush1.bf16.msra.mxu0 0
    %1207 = vmatprep.subr.bf16.mxu0 0
    %1208 = vmatpush1.bf16.msra.mxu0 0
    %1209 = vmatprep.subr.bf16.mxu0 0
    %1210 = vmatpush1.bf16.msra.mxu0 0
    %1211 = vmatprep.subr.bf16.mxu0 0
    %1212 = vmatpush1.bf16.msra.mxu0 0
    %1213 = vmatprep.subr.bf16.mxu0 0
    %1214 = vmatpush1.bf16.msra.mxu0 0
    %1215 = vmatprep.mubr.bf16.mxu0 0
    %1216 = vmatmul.mubr.bf16.gmra.mrb[0].mxu0 %v1141
    %v1217 = vpop.f32.mrb[0].mxu0
    %v1218 = vadd.f32 0.0, %v1217
    %v1219 = vpop.f32.mrb[0].mxu0
    %v1220 = vadd.f32 0.0, %v1219
    %v1221 = vpop.f32.mrb[0].mxu0
    %v1222 = vpop.f32.mrb[0].mxu0
    %1223 = vdwg.mxu0
    %v1224 = vadd.f32 %v1137, %v1177
    %v1225 = vadd.f32 %v1138, %v1179
    %v1226 = vadd.f32 %v1139, %v1218
    %v1227 = vadd.f32 %v1140, %v1220
    %v1228 = vtanh.pop %v1224
    %v1229 = vadd.f32 %v1228, 1.0
    %v1230 = vmul.f32 %v1229, 0.5
    %v1231 = vtanh.pop %v1225
    %v1232 = vadd.f32 %v1231, 1.0
    %v1233 = vmul.f32 %v1232, 0.5
    %v1234 = vtanh.pop %v1226
    %v1235 = vtanh.pop %v1227
    %v1236 = vadd.f32 %v1235, 1.0
    %v1237 = vmul.f32 %v1236, 0.5
    %v1238 = vmul.f32 %v1233, %v1134
    %v1239 = vmul.f32 %v1230, %v1234
    %v1240 = vadd.f32 %v1238, %v1239
    %v1241 = vtanh.pop %v1240
    %v1242 = vmul.f32 %v1237, %v1241
    %v1243 = vld [vmem:[#allocation2 + $0xc0] sm:$0xff]
    %v1244 = vld [vmem:[#allocation2 + $0xc8] sm:$0xff]
    %v1245 = vld [vmem:[#allocation2 + $0xd0] sm:$0xff]
    %v1246 = vld [vmem:[#allocation2 + $0xd8] sm:$0xff]
    %v1247 = vpack.c.bf16 %v1242, %v1242
    %1248 = vmatprep.subr.bf16.mxu0 %v549
    %1249 = vmatpush1.bf16.msra.mxu0 %v548
    %1250 = vmatprep.subr.bf16.mxu0 %v553
    %1251 = vmatpush1.bf16.msra.mxu0 %v552
    %1252 = vmatprep.subr.bf16.mxu0 %v557
    %1253 = vmatpush1.bf16.msra.mxu0 %v556
    %1254 = vmatprep.subr.bf16.mxu0 %v561
    %1255 = vmatpush1.bf16.msra.mxu0 %v560
    %1256 = vmatprep.subr.bf16.mxu0 %v565
    %1257 = vmatpush1.bf16.msra.mxu0 %v564
    %1258 = vmatprep.subr.bf16.mxu0 %v569
    %1259 = vmatpush1.bf16.msra.mxu0 %v568
    %1260 = vmatprep.subr.bf16.mxu0 %v573
    %1261 = vmatpush1.bf16.msra.mxu0 %v572
    %1262 = vmatprep.subr.bf16.mxu0 %v577
    %1263 = vmatpush1.bf16.msra.mxu0 %v576
    %1264 = vmatprep.subr.bf16.mxu0 0
    %1265 = vmatpush1.bf16.msra.mxu0 0
    %1266 = vmatprep.subr.bf16.mxu0 0
    %1267 = vmatpush1.bf16.msra.mxu0 0
    %1268 = vmatprep.subr.bf16.mxu0 0
    %1269 = vmatpush1.bf16.msra.mxu0 0
    %1270 = vmatprep.subr.bf16.mxu0 0
    %1271 = vmatpush1.bf16.msra.mxu0 0
    %1272 = vmatprep.subr.bf16.mxu0 0
    %1273 = vmatpush1.bf16.msra.mxu0 0
    %1274 = vmatprep.subr.bf16.mxu0 0
    %1275 = vmatpush1.bf16.msra.mxu0 0
    %1276 = vmatprep.subr.bf16.mxu0 0
    %1277 = vmatpush1.bf16.msra.mxu0 0
    %1278 = vmatprep.subr.bf16.mxu0 0
    %1279 = vmatpush1.bf16.msra.mxu0 0
    %1280 = vmatprep.mubr.bf16.mxu0 0
    %1281 = vmatmul.mubr.bf16.gmra.mrb[0].mxu0 %v1247
    %v1282 = vpop.f32.mrb[0].mxu0
    %v1283 = vadd.f32 0.0, %v1282
    %v1284 = vpop.f32.mrb[0].mxu0
    %v1285 = vadd.f32 0.0, %v1284
    %v1286 = vpop.f32.mrb[0].mxu0
    %v1287 = vpop.f32.mrb[0].mxu0
    %1288 = vdwg.mxu0
    %1289 = vmatprep.subr.bf16.mxu0 %v551
    %1290 = vmatpush1.bf16.msra.mxu0 %v550
    %1291 = vmatprep.subr.bf16.mxu0 %v555
    %1292 = vmatpush1.bf16.msra.mxu0 %v554
    %1293 = vmatprep.subr.bf16.mxu0 %v559
    %1294 = vmatpush1.bf16.msra.mxu0 %v558
    %1295 = vmatprep.subr.bf16.mxu0 %v563
    %1296 = vmatpush1.bf16.msra.mxu0 %v562
    %1297 = vmatprep.subr.bf16.mxu0 %v567
    %1298 = vmatpush1.bf16.msra.mxu0 %v566
    %1299 = vmatprep.subr.bf16.mxu0 %v571
    %1300 = vmatpush1.bf16.msra.mxu0 %v570
    %1301 = vmatprep.subr.bf16.mxu0 %v575
    %1302 = vmatpush1.bf16.msra.mxu0 %v574
    %1303 = vmatprep.subr.bf16.mxu0 %v579
    %1304 = vmatpush1.bf16.msra.mxu0 %v578
    %1305 = vmatprep.subr.bf16.mxu0 0
    %1306 = vmatpush1.bf16.msra.mxu0 0
    %1307 = vmatprep.subr.bf16.mxu0 0
    %1308 = vmatpush1.bf16.msra.mxu0 0
    %1309 = vmatprep.subr.bf16.mxu0 0
    %1310 = vmatpush1.bf16.msra.mxu0 0
    %1311 = vmatprep.subr.bf16.mxu0 0
    %1312 = vmatpush1.bf16.msra.mxu0 0
    %1313 = vmatprep.subr.bf16.mxu0 0
    %1314 = vmatpush1.bf16.msra.mxu0 0
    %1315 = vmatprep.subr.bf16.mxu0 0
    %1316 = vmatpush1.bf16.msra.mxu0 0
    %1317 = vmatprep.subr.bf16.mxu0 0
    %1318 = vmatpush1.bf16.msra.mxu0 0
    %1319 = vmatprep.subr.bf16.mxu0 0
    %1320 = vmatpush1.bf16.msra.mxu0 0
    %1321 = vmatprep.mubr.bf16.mxu0 0
    %1322 = vmatmul.mubr.bf16.gmra.mrb[0].mxu0 %v1247
    %v1323 = vpop.f32.mrb[0].mxu0
    %v1324 = vadd.f32 0.0, %v1323
    %v1325 = vpop.f32.mrb[0].mxu0
    %v1326 = vadd.f32 0.0, %v1325
    %v1327 = vpop.f32.mrb[0].mxu0
    %v1328 = vpop.f32.mrb[0].mxu0
    %1329 = vdwg.mxu0
    %v1330 = vadd.f32 %v1243, %v1283
    %v1331 = vadd.f32 %v1244, %v1285
    %v1332 = vadd.f32 %v1245, %v1324
    %v1333 = vadd.f32 %v1246, %v1326
    %v1334 = vtanh.pop %v1330
    %v1335 = vadd.f32 %v1334, 1.0
    %v1336 = vmul.f32 %v1335, 0.5
    %v1337 = vtanh.pop %v1331
    %v1338 = vadd.f32 %v1337, 1.0
    %v1339 = vmul.f32 %v1338, 0.5
    %v1340 = vtanh.pop %v1332
    %v1341 = vtanh.pop %v1333
    %v1342 = vadd.f32 %v1341, 1.0
    %v1343 = vmul.f32 %v1342, 0.5
    %v1344 = vmul.f32 %v1339, %v1240
    %v1345 = vmul.f32 %v1336, %v1340
    %v1346 = vadd.f32 %v1344, %v1345
    %v1347 = vtanh.pop %v1346
    %v1348 = vmul.f32 %v1343, %v1347
    %v1349 = vld [vmem:[#allocation2 + $0xe0] sm:$0xff]
    %v1350 = vld [vmem:[#allocation2 + $0xe8] sm:$0xff]
    %v1351 = vld [vmem:[#allocation2 + $0xf0] sm:$0xff]
    %v1352 = vld [vmem:[#allocation2 + $0xf8] sm:$0xff]
    %v1353 = vpack.c.bf16 %v1348, %v1348
    %1354 = vmatprep.subr.bf16.mxu0 %v549
    %1355 = vmatpush1.bf16.msra.mxu0 %v548
    %1356 = vmatprep.subr.bf16.mxu0 %v553
    %1357 = vmatpush1.bf16.msra.mxu0 %v552
    %1358 = vmatprep.subr.bf16.mxu0 %v557
    %1359 = vmatpush1.bf16.msra.mxu0 %v556
    %1360 = vmatprep.subr.bf16.mxu0 %v561
    %1361 = vmatpush1.bf16.msra.mxu0 %v560
    %1362 = vmatprep.subr.bf16.mxu0 %v565
    %1363 = vmatpush1.bf16.msra.mxu0 %v564
    %1364 = vmatprep.subr.bf16.mxu0 %v569
    %1365 = vmatpush1.bf16.msra.mxu0 %v568
    %1366 = vmatprep.subr.bf16.mxu0 %v573
    %1367 = vmatpush1.bf16.msra.mxu0 %v572
    %1368 = vmatprep.subr.bf16.mxu0 %v577
    %1369 = vmatpush1.bf16.msra.mxu0 %v576
    %1370 = vmatprep.subr.bf16.mxu0 0
    %1371 = vmatpush1.bf16.msra.mxu0 0
    %1372 = vmatprep.subr.bf16.mxu0 0
    %1373 = vmatpush1.bf16.msra.mxu0 0
    %1374 = vmatprep.subr.bf16.mxu0 0
    %1375 = vmatpush1.bf16.msra.mxu0 0
    %1376 = vmatprep.subr.bf16.mxu0 0
    %1377 = vmatpush1.bf16.msra.mxu0 0
    %1378 = vmatprep.subr.bf16.mxu0 0
    %1379 = vmatpush1.bf16.msra.mxu0 0
    %1380 = vmatprep.subr.bf16.mxu0 0
    %1381 = vmatpush1.bf16.msra.mxu0 0
    %1382 = vmatprep.subr.bf16.mxu0 0
    %1383 = vmatpush1.bf16.msra.mxu0 0
    %1384 = vmatprep.subr.bf16.mxu0 0
    %1385 = vmatpush1.bf16.msra.mxu0 0
    %1386 = vmatprep.mubr.bf16.mxu0 0
    %1387 = vmatmul.mubr.bf16.gmra.mrb[0].mxu0 %v1353
    %v1388 = vpop.f32.mrb[0].mxu0
    %v1389 = vadd.f32 0.0, %v1388
    %v1390 = vpop.f32.mrb[0].mxu0
    %v1391 = vadd.f32 0.0, %v1390
    %v1392 = vpop.f32.mrb[0].mxu0
    %v1393 = vpop.f32.mrb[0].mxu0
    %1394 = vdwg.mxu0
    %1395 = vmatprep.subr.bf16.mxu0 %v551
    %1396 = vmatpush1.bf16.msra.mxu0 %v550
    %1397 = vmatprep.subr.bf16.mxu0 %v555
    %1398 = vmatpush1.bf16.msra.mxu0 %v554
    %1399 = vmatprep.subr.bf16.mxu0 %v559
    %1400 = vmatpush1.bf16.msra.mxu0 %v558
    %1401 = vmatprep.subr.bf16.mxu0 %v563
    %1402 = vmatpush1.bf16.msra.mxu0 %v562
    %1403 = vmatprep.subr.bf16.mxu0 %v567
    %1404 = vmatpush1.bf16.msra.mxu0 %v566
    %1405 = vmatprep.subr.bf16.mxu0 %v571
    %1406 = vmatpush1.bf16.msra.mxu0 %v570
    %1407 = vmatprep.subr.bf16.mxu0 %v575
    %1408 = vmatpush1.bf16.msra.mxu0 %v574
    %1409 = vmatprep.subr.bf16.mxu0 %v579
    %1410 = vmatpush1.bf16.msra.mxu0 %v578
    %1411 = vmatprep.subr.bf16.mxu0 0
    %1412 = vmatpush1.bf16.msra.mxu0 0
    %1413 = vmatprep.subr.bf16.mxu0 0
    %1414 = vmatpush1.bf16.msra.mxu0 0
    %1415 = vmatprep.subr.bf16.mxu0 0
    %1416 = vmatpush1.bf16.msra.mxu0 0
    %1417 = vmatprep.subr.bf16.mxu0 0
    %1418 = vmatpush1.bf16.msra.mxu0 0
    %1419 = vmatprep.subr.bf16.mxu0 0
    %1420 = vmatpush1.bf16.msra.mxu0 0
    %1421 = vmatprep.subr.bf16.mxu0 0
    %1422 = vmatpush1.bf16.msra.mxu0 0
    %1423 = vmatprep.subr.bf16.mxu0 0
    %1424 = vmatpush1.bf16.msra.mxu0 0
    %1425 = vmatprep.subr.bf16.mxu0 0
    %1426 = vmatpush1.bf16.msra.mxu0 0
    %1427 = vmatprep.mubr.bf16.mxu0 0
    %1428 = vmatmul.mubr.bf16.gmra.mrb[0].mxu0 %v1353
    %v1429 = vpop.f32.mrb[0].mxu0
    %v1430 = vadd.f32 0.0, %v1429
    %v1431 = vpop.f32.mrb[0].mxu0
    %v1432 = vadd.f32 0.0, %v1431
    %v1433 = vpop.f32.mrb[0].mxu0
    %v1434 = vpop.f32.mrb[0].mxu0
    %1435 = vdwg.mxu0
    %v1436 = vadd.f32 %v1349, %v1389
    %v1437 = vadd.f32 %v1350, %v1391
    %v1438 = vadd.f32 %v1351, %v1430
    %v1439 = vadd.f32 %v1352, %v1432
    %v1440 = vtanh.pop %v1436
    %v1441 = vadd.f32 %v1440, 1.0
    %v1442 = vmul.f32 %v1441, 0.5
    %v1443 = vtanh.pop %v1437
    %v1444 = vadd.f32 %v1443, 1.0
    %v1445 = vmul.f32 %v1444, 0.5
    %v1446 = vtanh.pop %v1438
    %v1447 = vtanh.pop %v1439
    %v1448 = vadd.f32 %v1447, 1.0
    %v1449 = vmul.f32 %v1448, 0.5
    %v1450 = vmul.f32 %v1445, %v1346
    %v1451 = vmul.f32 %v1442, %v1446
    %v1452 = vadd.f32 %v1450, %v1451
    %v1453 = vtanh.pop %v1452
    %v1454 = vmul.f32 %v1449, %v1453
    %v1455 = vpack.c.bf16 %v1454, %v1454
    %v1456 = vld [vmem:[%s4] sm:$0xf]
    %v1457 = vld [vmem:[%s4 + $0x4] sm:$0xf]
    %v1458 = vld [vmem:[%s4 + $0x8] sm:$0xf]
    %v1459 = vld [vmem:[%s4 + $0xc] sm:$0xf]
    %v1460 = vld [vmem:[%s4 + $0x10] sm:$0xf]
    %v1461 = vld [vmem:[%s4 + $0x14] sm:$0xf]
    %v1462 = vld [vmem:[%s4 + $0x18] sm:$0xf]
    %v1463 = vld [vmem:[%s4 + $0x1c] sm:$0xf]
    %v1464 = vld [vmem:[%s4 + $0x20] sm:$0xf]
    %v1465 = vld [vmem:[%s4 + $0x24] sm:$0xf]
    %v1466 = vld [vmem:[%s4 + $0x28] sm:$0xf]
    %v1467 = vld [vmem:[%s4 + $0x2c] sm:$0xf]
    %v1468 = vld [vmem:[%s4 + $0x30] sm:$0xf]
    %v1469 = vld [vmem:[%s4 + $0x34] sm:$0xf]
    %v1470 = vld [vmem:[%s4 + $0x38] sm:$0xf]
    %v1471 = vld [vmem:[%s4 + $0x3c] sm:$0xf]
    %v1472 = vld [vmem:[%s5] sm:$0x1]
    %v1474 = vlaneseq
    %v1475 = vshrl.u32 %v1474, 7
    %v1476 = vsub.s32 0, %v1475
    %v1477 = vrot.slane %v1472, %v1476
    %v1495 = vunpack.c.l.b16 %v1456
    %v1496 = vunpack.c.l.b16 %v1457
    %v1497 = vunpack.c.l.b16 %v1458
    %v1498 = vunpack.c.l.b16 %v1459
    %v1499 = vunpack.c.l.b16 %v1460
    %v1500 = vunpack.c.l.b16 %v1461
    %v1501 = vunpack.c.l.b16 %v1462
    %v1502 = vunpack.c.l.b16 %v1463
    %v1503 = vunpack.c.l.b16 %v1464
    %v1504 = vunpack.c.l.b16 %v1465
    %v1505 = vunpack.c.l.b16 %v1466
    %v1506 = vunpack.c.l.b16 %v1467
    %v1507 = vunpack.c.l.b16 %v1468
    %v1508 = vunpack.c.l.b16 %v1469
    %v1509 = vunpack.c.l.b16 %v1470
    %v1510 = vunpack.c.l.b16 %v1471
    %v1511 = vpack.c.b16 %v1496, %v1495
    %v1512 = vpack.c.b16 %v1498, %v1497
    %v1513 = vpack.c.b16 %v1500, %v1499
    %v1514 = vpack.c.b16 %v1502, %v1501
    %v1515 = vpack.c.b16 %v1504, %v1503
    %v1516 = vpack.c.b16 %v1506, %v1505
    %v1517 = vpack.c.b16 %v1508, %v1507
    %v1518 = vpack.c.b16 %v1510, %v1509
    %1527 = vmatprep.subr.bf16.mxu0 0
    %1528 = vmatpush1.bf16.msra.mxu0 %v1511
    %1529 = vmatprep.subr.bf16.mxu0 0
    %1530 = vmatpush1.bf16.msra.mxu0 %v1512
    %1531 = vmatprep.subr.bf16.mxu0 0
    %1532 = vmatpush1.bf16.msra.mxu0 %v1513
    %1533 = vmatprep.subr.bf16.mxu0 0
    %1534 = vmatpush1.bf16.msra.mxu0 %v1514
    %1535 = vmatprep.subr.bf16.mxu0 0
    %1536 = vmatpush1.bf16.msra.mxu0 %v1515
    %1537 = vmatprep.subr.bf16.mxu0 0
    %1538 = vmatpush1.bf16.msra.mxu0 %v1516
    %1539 = vmatprep.subr.bf16.mxu0 0
    %1540 = vmatpush1.bf16.msra.mxu0 %v1517
    %1541 = vmatprep.subr.bf16.mxu0 0
    %1542 = vmatpush1.bf16.msra.mxu0 %v1518
    %1543 = vmatprep.subr.bf16.mxu0 0
    %1544 = vmatpush1.bf16.msra.mxu0 0
    %1545 = vmatprep.subr.bf16.mxu0 0
    %1546 = vmatpush1.bf16.msra.mxu0 0
    %1547 = vmatprep.subr.bf16.mxu0 0
    %1548 = vmatpush1.bf16.msra.mxu0 0
    %1549 = vmatprep.subr.bf16.mxu0 0
    %1550 = vmatpush1.bf16.msra.mxu0 0
    %1551 = vmatprep.subr.bf16.mxu0 0
    %1552 = vmatpush1.bf16.msra.mxu0 0
    %1553 = vmatprep.subr.bf16.mxu0 0
    %1554 = vmatpush1.bf16.msra.mxu0 0
    %1555 = vmatprep.subr.bf16.mxu0 0
    %1556 = vmatpush1.bf16.msra.mxu0 0
    %1557 = vmatprep.subr.bf16.mxu0 0
    %1558 = vmatpush1.bf16.msra.mxu0 0
    %1559 = vmatprep.mubr.bf16.mxu0 0
    %1560 = vmatmul.mubr.bf16.gmra.mrb[0].mxu0 %v1455
    %v1561 = vpop.f32.mrb[0].mxu0
    %v1562 = vadd.f32 %v1477, %v1561
    %v1563 = vpop.f32.mrb[0].mxu0
    %v1564 = vpop.f32.mrb[0].mxu0
    %v1565 = vpop.f32.mrb[0].mxu0
    %1566 = vdwg.mxu0
    %1567 = vst [vmem:[#allocation8] sm:$0xff] %v1562
    // Predicated region
    $region34: #{tpu_custom_call.1} parent=1 // pred_check
      _
    $region35: #{tpu_custom_call.1} parent=1 // pred_check_branch
      %1569 = sbr.rel (0) target = $region37
    $region36: #{tpu_custom_call.1} parent=1 // pred_region
      %s1571 = ssub.s32 128, 128
      %1572 = vsyncadd [#allocation5], %s1571
      %s1574 = sshll.u32 [#allocation8], 4
      %s1575 = int_to_ptr.vmem [resolvable:$true] %s1574
      %1577 = dma.vmem_to_hbm [thread:$0]  %s1575, 128, %s6, [#allocation5]
    $region37: #{tpu_custom_call.1} parent=1 // pred_fallthru
      _
    // Predicated region
    $region38: #{tpu_custom_call.1} parent=1 // pred_check
      _
    $region39: #{tpu_custom_call.1} parent=1 // pred_check_branch
      %1579 = sbr.rel (0) target = $region41
    $region40: #{tpu_custom_call.1} parent=1 // pred_region
      %1580 = dma.done [#allocation5], 128
    $region41: #{tpu_custom_call.1} parent=1 // pred_fallthru
      _
    %1581 = vsyncpa [#allocation4], 1
    %1582 = vsyncpa [#allocation7], 1
    %1583 = vsyncpa [#allocation5], 1

</llo_original>
